<compile_context>
chip_gen: v7x
topology: tpu7x:2x2x1
jax: 0.10.0
libtpu: 0.0.40
codegen_flags: <defaults>
</compile_context>

<pallas_src>
import functools

import jax
import jax.numpy as jnp
from jax import lax
from jax.experimental import pallas as pl
from jax.experimental.pallas import tpu as pltpu

GRU_CONFIG = {"hidden_dim": 32, "num_layers": 2, "dropout": 0.1}

_UNROLL_T_LIMIT = 32  # fully unroll the time loop only below this


# ----------------------------- Fused Pallas kernel ---------------------------

def fused_gru_regressor_kernel(*refs, T, B, H, L):
    """Fused forward pass (B is the sublane-padded batch).

    refs layout (all VMEM, whole-array blocks):
      x_flat (T*B, D) bf16                       time-major, flattened rows
      layer 0: wih0 (D,3H) bf16, whh0 (H,3H) bf16, bg0 (1,3H) f32, bhn0 (1,H) f32
      layers l>=1: wf (2H,4H) bf16, bf (1,4H) f32
      ln_g (1,H), ln_b (1,H), w1 (H,H2), b1 (1,H2), w2 (H2,1), b2 (1,1)  f32
      out (B,1) f32
    Gate column order is [r | z | n] (PyTorch). For fused upper layers the
    4H columns are [r | z | n_input_side | n_hidden_side] so the r-gating of
    the hidden n-term stays exact.
    """
    x_ref = refs[0]
    idx = 1
    wih0_ref, whh0_ref, bg0_ref, bhn0_ref = refs[idx:idx + 4]
    idx += 4
    upper_refs = []
    for _ in range(1, L):
        upper_refs.append((refs[idx], refs[idx + 1]))
        idx += 2
    lng_ref, lnb_ref, fw1_ref, fb1_ref, fw2_ref, fb2_ref, out_ref = refs[idx:]

    H2, H3, H4 = 2 * H, 3 * H, 4 * H

    # Load weights once; hoist the r-gated hidden-bias broadcast out of the
    # recurrence (no per-iteration broadcast_in_dim re-emission).
    wih0 = wih0_ref[...]                                   # bf16
    whh0 = whh0_ref[...]                                   # bf16
    bg0 = bg0_ref[...]                                     # (1,3H) f32
    bhn0 = jnp.broadcast_to(bhn0_ref[...], (B, H))         # (B,H) f32
    upper_w = [(wf_ref[...], bf_ref[...]) for wf_ref, bf_ref in upper_refs]

    # Layer-0 input projections for ALL timesteps in one bulk bf16 MXU matmul
    # (biases folded) -> the serial loop only does hidden-side work.
    # TODO(synk): at production T*B, chunk the time axis (grid + VMEM-carried h
    # via pl.when) so the (T*B,3H) xp0 slab fits v7x's 64 MiB VMEM.
    xp0 = jnp.dot(x_ref[...], wih0, preferred_element_type=jnp.float32) + bg0

    def layer0_step(xp_t, h):
        # One hidden-side matmul (B,H)@(H,3H); fused r|z sigmoid over 2H lanes.
        hp = jnp.dot(h.astype(jnp.bfloat16), whh0,
                     preferred_element_type=jnp.float32)
        rz = jax.nn.sigmoid(xp_t[:, 0:H2] + hp[:, 0:H2])
        r = rz[:, 0:H]
        z = rz[:, H:H2]
        n = jnp.tanh(xp_t[:, H2:H3] + r * (hp[:, H2:H3] + bhn0))
        return (1.0 - z) * n + z * h

    def upper_step(h_prev, h, wf, bf):
        # Single fused (B,2H)@(2H,4H) matmul covering input- and hidden-side
        # gates; columns = [r | z | n_x | n_h], n_h kept separate for r-gating.
        inp = jnp.concatenate([h_prev, h], axis=-1).astype(jnp.bfloat16)
        slab = jnp.dot(inp, wf, preferred_element_type=jnp.float32) + bf
        rz = jax.nn.sigmoid(slab[:, 0:H2])
        r = rz[:, 0:H]
        z = rz[:, H:H2]
        n = jnp.tanh(slab[:, H2:H3] + r * slab[:, H3:H4])
        return (1.0 - z) * n + z * h

    hs = [jnp.zeros((B, H), jnp.float32) for _ in range(L)]

    if T <= _UNROLL_T_LIMIT:
        # Fully static unroll: scheduler sees the whole dependence graph, so
        # layer l step t overlaps layer 0 step t+1. Slices are tile-aligned
        # free views thanks to the sublane-padded batch.
        for t in range(T):
            hs[0] = layer0_step(xp0[t * B:(t + 1) * B, :], hs[0])
            for l in range(1, L):
                wf, bf = upper_w[l - 1]
                hs[l] = upper_step(hs[l - 1], hs[l], wf, bf)
            # TODO(synk): inter-layer GRU dropout (p=0.1) omitted — inference.
    else:
        # Bounded vreg pressure for long sequences.
        xp0_r = xp0.reshape(T, B, H3)

        def body(t, carry):
            cur = list(carry)
            cur[0] = layer0_step(xp0_r[t], cur[0])
            for l in range(1, L):
                wf, bf = upper_w[l - 1]
                cur[l] = upper_step(cur[l - 1], cur[l], wf, bf)
            return tuple(cur)

        hs = list(lax.fori_loop(0, T, body, tuple(hs), unroll=2))

    # LayerNorm(eps=1e-5) + Linear -> ReLU -> Linear head on last hidden (f32).
    h = hs[-1]
    mu = jnp.mean(h, axis=-1, keepdims=True)
    var = jnp.mean((h - mu) ** 2, axis=-1, keepdims=True)
    y = (h - mu) * lax.rsqrt(var + 1e-5) * lng_ref[...] + lnb_ref[...]
    a = jnp.maximum(
        jnp.dot(y, fw1_ref[...], preferred_element_type=jnp.float32)
        + fb1_ref[...], 0.0)
    # TODO(synk): dropout between ReLU and final Linear omitted — inference.
    # TODO(synk): if this kernel is later gridded over batch, write a lane-dense
    # padded output slab instead of the (B,1) masked store.
    out_ref[...] = (jnp.dot(a, fw2_ref[...], preferred_element_type=jnp.float32)
                    + fb2_ref[...])


# ------------------------------ Wrapper ---------------------------------------

def _fuse_upper_layer(p, H):
    """Build the (2H,4H) block weight and (1,4H) bias for a layer l>=1."""
    wih, whh = p["wih"], p["whh"]                       # (H,3H), (H,3H)
    zeros = jnp.zeros((H, H), jnp.float32)
    top = jnp.concatenate([wih[:, :2 * H], wih[:, 2 * H:], zeros], axis=1)
    bot = jnp.concatenate([whh[:, :2 * H], zeros, whh[:, 2 * H:]], axis=1)
    wf = jnp.concatenate([top, bot], axis=0)            # (2H, 4H)
    bf = jnp.concatenate([p["bg"], p["bhn"]], axis=1)   # (1, 4H)
    return wf, bf


def gru_regressor_forward(x, params):
    """x: (B, T, D) float32 (batch_first, as in the PyTorch module)."""
    B, T, D = x.shape
    H = params["layers"][0]["whh"].shape[0]
    L = len(params["layers"])

    # Pad batch to the f32 sublane granule (8): per-step values fill whole
    # sublanes and every xp0 slice lands on (8,128) tile boundaries.
    B_pad = max(8, ((B + 7) // 8) * 8)
    x = x.astype(jnp.float32)
    if B_pad != B:
        x = jnp.concatenate(
            [x, jnp.zeros((B_pad - B, T, D), jnp.float32)], axis=0)

    # Time-major + flatten in the XLA wrapper so the kernel only sees 2-D,
    # lane-friendly operands. Matmul operands are pre-cast to bf16 (f32 MXU
    # accumulation happens inside the kernel).
    x_flat = jnp.transpose(x, (1, 0, 2)).reshape(T * B_pad, D)

    p0 = params["layers"][0]
    args = [x_flat.astype(jnp.bfloat16),
            p0["wih"].astype(jnp.bfloat16),
            p0["whh"].astype(jnp.bfloat16),
            p0["bg"], p0["bhn"]]
    for p in params["layers"][1:]:
        wf, bf = _fuse_upper_layer(p, H)
        args += [wf.astype(jnp.bfloat16), bf]
    args += [params["ln_g"], params["ln_b"],
             params["w1"], params["b1"], params["w2"], params["b2"]]

    kernel = functools.partial(fused_gru_regressor_kernel,
                               T=T, B=B_pad, H=H, L=L)

    # Explicit scoped-VMEM budget: resident args + hoisted xp0 slab + headroom.
    needed = sum(int(a.size) * a.dtype.itemsize for a in args)
    needed += T * B_pad * 3 * H * 4 + (4 << 20)
    vmem_limit = int(min(max(needed, 32 << 20), 64 << 20))

    # TODO(synk): for production B, add a batch grid axis
    # (dimension_semantics=("parallel",)) to use both v7x TensorCores and keep
    # per-core VMEM bounded; unnecessary at these tiny sizes.
    out = pl.pallas_call(
        kernel,
        out_shape=jax.ShapeDtypeStruct((B_pad, 1), jnp.float32),
        in_specs=[pl.BlockSpec(memory_space=pltpu.MemorySpace.VMEM)] * len(args),
        out_specs=pl.BlockSpec(memory_space=pltpu.MemorySpace.VMEM),
        compiler_params=pltpu.CompilerParams(vmem_limit_bytes=vmem_limit),
    )(*args)
    return out[:B, 0]                                     # un-pad + squeeze(-1)


# ------------------------- Deterministic init ---------------------------------

def init_params(key, input_dim, hidden_dim, num_layers):
    H = hidden_dim
    scale = 1.0 / jnp.sqrt(H)
    ks = jax.random.split(key, 4 * num_layers + 4)

    def u(k, shape):
        return jax.random.uniform(k, shape, jnp.float32, -scale, scale)

    layers = []
    ki = 0
    in_dim = input_dim
    for _ in range(num_layers):
        w_ih = u(ks[ki], (3 * H, in_dim)); ki += 1        # PyTorch layout [r;z;n]
        w_hh = u(ks[ki], (3 * H, H)); ki += 1
        b_ih = u(ks[ki], (3 * H,)); ki += 1
        b_hh = u(ks[ki], (3 * H,)); ki += 1
        layers.append(dict(
            wih=w_ih.T,                                   # (in_dim,3H) [Wir|Wiz|Win]
            whh=w_hh.T,                                   # (H,3H)      [Whr|Whz|Whn]
            bg=jnp.concatenate([b_ih[0:H] + b_hh[0:H],
                                b_ih[H:2 * H] + b_hh[H:2 * H],
                                b_ih[2 * H:]]).reshape(1, 3 * H),
            bhn=b_hh[2 * H:].reshape(1, H),
        ))
        in_dim = H

    H2 = H // 2
    return dict(
        layers=layers,
        ln_g=jnp.ones((1, H), jnp.float32),
        ln_b=jnp.zeros((1, H), jnp.float32),
        w1=u(ks[ki], (H, H2)),
        b1=u(ks[ki + 1], (1, H2)),
        w2=u(ks[ki + 2], (H2, 1)),
        b2=u(ks[ki + 3], (1, 1)),
    )


# ----------------------------- Pure-JAX reference -----------------------------

def reference_forward(x, params, mxu_dtype=None):
    """f32 reference; if mxu_dtype=bf16, mimic the kernel's bf16 matmul operands."""
    def mm(a, b):
        if mxu_dtype is not None:
            a = a.astype(mxu_dtype)
            b = b.astype(mxu_dtype)
        return jnp.dot(a, b, preferred_element_type=jnp.float32)

    h_seq = jnp.transpose(x, (1, 0, 2)).astype(jnp.float32)   # (T, B, D)
    _, B, _ = h_seq.shape
    H = params["layers"][0]["whh"].shape[0]
    for p in params["layers"]:
        wih, whh, bg, bhn = p["wih"], p["whh"], p["bg"], p["bhn"]

        def step(h, x_t):
            xp = mm(x_t, wih) + bg
            hp = mm(h, whh)
            r = jax.nn.sigmoid(xp[:, :H] + hp[:, :H])
            z = jax.nn.sigmoid(xp[:, H:2 * H] + hp[:, H:2 * H])
            n = jnp.tanh(xp[:, 2 * H:] + r * (hp[:, 2 * H:] + bhn))
            h_new = (1.0 - z) * n + z * h
            return h_new, h_new

        _, h_seq = lax.scan(step, jnp.zeros((B, H), jnp.float32), h_seq)
    h_last = h_seq[-1]
    mu = jnp.mean(h_last, axis=-1, keepdims=True)
    var = jnp.mean((h_last - mu) ** 2, axis=-1, keepdims=True)
    y = (h_last - mu) * lax.rsqrt(var + 1e-5) * params["ln_g"] + params["ln_b"]
    a = jnp.maximum(y @ params["w1"] + params["b1"], 0.0)
    return (a @ params["w2"] + params["b2"])[:, 0]


# --------------------------------- Main ----------------------------------------

if __name__ == "__main__":
    B, T, D = 4, 8, 6                       # batch, seq, input_dim
    H, L = GRU_CONFIG["hidden_dim"], GRU_CONFIG["num_layers"]

    key = jax.random.PRNGKey(0)
    kx, kp = jax.random.split(key)
    x = jax.random.normal(kx, (B, T, D), jnp.float32)
    params = init_params(kp, D, H, L)

    out = gru_regressor_forward(x, params)
    out = jax.block_until_ready(out)
    assert out.shape == (B,)
    assert bool(jnp.all(jnp.isfinite(out)))

    # Tight check vs a reference that mimics the kernel's bf16 matmul operands.
    ref_bf16 = reference_forward(x, params, mxu_dtype=jnp.bfloat16)
    assert jnp.allclose(out, ref_bf16, atol=3e-3, rtol=3e-3), (out, ref_bf16)

    # Looser sanity check vs the full-f32 PyTorch-semantics reference
    # (bf16 MXU operands shift numerics slightly).
    ref_f32 = reference_forward(x, params)
    assert jnp.allclose(out, ref_f32, atol=5e-2, rtol=5e-2), (out, ref_f32)

    print("KERNEL_OK")
</pallas_src>

<mosaic_0001>
module attributes {stable_mosaic.version = 11 : i64} {
  func.func @fused_gru_regressor_kernel(%arg0: memref<64x6xbf16, #tpu.memory_space<vmem>>, %arg1: memref<6x96xbf16, #tpu.memory_space<vmem>>, %arg2: memref<32x96xbf16, #tpu.memory_space<vmem>>, %arg3: memref<1x96xf32, #tpu.memory_space<vmem>>, %arg4: memref<1x32xf32, #tpu.memory_space<vmem>>, %arg5: memref<64x128xbf16, #tpu.memory_space<vmem>>, %arg6: memref<1x128xf32, #tpu.memory_space<vmem>>, %arg7: memref<1x32xf32, #tpu.memory_space<vmem>>, %arg8: memref<1x32xf32, #tpu.memory_space<vmem>>, %arg9: memref<32x16xf32, #tpu.memory_space<vmem>>, %arg10: memref<1x16xf32, #tpu.memory_space<vmem>>, %arg11: memref<16x1xf32, #tpu.memory_space<vmem>>, %arg12: memref<1x1xf32, #tpu.memory_space<vmem>>, %arg13: memref<8x1xf32, #tpu.memory_space<vmem>>) attributes {dimension_semantics = [], scalar_prefetch = 0 : i64, scratch_operands = 0 : i64, tpu.core_type = #tpu.core_type<tc>} {
    %c0 = arith.constant 0 : index
    %c0_0 = arith.constant 0 : index
    %0 = vector.load %arg1[%c0, %c0_0] : memref<6x96xbf16, #tpu.memory_space<vmem>>, vector<6x96xbf16>
    %c0_1 = arith.constant 0 : index
    %c0_2 = arith.constant 0 : index
    %1 = vector.load %arg2[%c0_1, %c0_2] : memref<32x96xbf16, #tpu.memory_space<vmem>>, vector<32x96xbf16>
    %c0_3 = arith.constant 0 : index
    %c0_4 = arith.constant 0 : index
    %2 = vector.load %arg3[%c0_3, %c0_4] : memref<1x96xf32, #tpu.memory_space<vmem>>, vector<1x96xf32>
    %c0_5 = arith.constant 0 : index
    %c0_6 = arith.constant 0 : index
    %3 = vector.load %arg4[%c0_5, %c0_6] : memref<1x32xf32, #tpu.memory_space<vmem>>, vector<1x32xf32>
    %4 = vector.shape_cast %3 : vector<1x32xf32> to vector<1x32xf32>
    %5 = vector.broadcast %4 : vector<1x32xf32> to vector<8x32xf32>
    %c0_7 = arith.constant 0 : index
    %c0_8 = arith.constant 0 : index
    %6 = vector.load %arg5[%c0_7, %c0_8] : memref<64x128xbf16, #tpu.memory_space<vmem>>, vector<64x128xbf16>
    %c0_9 = arith.constant 0 : index
    %c0_10 = arith.constant 0 : index
    %7 = vector.load %arg6[%c0_9, %c0_10] : memref<1x128xf32, #tpu.memory_space<vmem>>, vector<1x128xf32>
    %c0_11 = arith.constant 0 : index
    %c0_12 = arith.constant 0 : index
    %8 = vector.load %arg0[%c0_11, %c0_12] : memref<64x6xbf16, #tpu.memory_space<vmem>>, vector<64x6xbf16>
    %cst = arith.constant dense<0.000000e+00> : vector<64x96xf32>
    %9 = tpu.matmul %8, %0, %cst {dimension_numbers = #tpu.dot_dimension_numbers<[1], [0], [0], [1], [0, 0, 1, 1], [], []>} : vector<64x6xbf16>, vector<6x96xbf16>, vector<64x96xf32> -> vector<64x96xf32>
    %10 = vector.broadcast %2 : vector<1x96xf32> to vector<64x96xf32>
    %11 = arith.addf %9, %10 : vector<64x96xf32>
    %cst_13 = arith.constant 0.000000e+00 : f32
    %12 = vector.broadcast %cst_13 : f32 to vector<8x32xf32>
    %cst_14 = arith.constant 0.000000e+00 : f32
    %13 = vector.broadcast %cst_14 : f32 to vector<8x32xf32>
    %14 = vector.extract_strided_slice %11 {offsets = [0, 0], sizes = [8, 96], strides = [1, 1]} : vector<64x96xf32> to vector<8x96xf32>
    %15 = arith.truncf %12 : vector<8x32xf32> to vector<8x32xbf16>
    %cst_15 = arith.constant dense<0.000000e+00> : vector<8x96xf32>
    %16 = tpu.matmul %15, %1, %cst_15 {dimension_numbers = #tpu.dot_dimension_numbers<[1], [0], [0], [1], [0, 0, 1, 1], [], []>} : vector<8x32xbf16>, vector<32x96xbf16>, vector<8x96xf32> -> vector<8x96xf32>
    %17 = vector.extract_strided_slice %14 {offsets = [0, 0], sizes = [8, 64], strides = [1, 1]} : vector<8x96xf32> to vector<8x64xf32>
    %18 = vector.extract_strided_slice %16 {offsets = [0, 0], sizes = [8, 64], strides = [1, 1]} : vector<8x96xf32> to vector<8x64xf32>
    %19 = arith.addf %17, %18 : vector<8x64xf32>
    %20 = arith.negf %19 : vector<8x64xf32>
    %21 = math.exp %20 : vector<8x64xf32>
    %cst_16 = arith.constant 1.000000e+00 : f32
    %22 = vector.broadcast %cst_16 : f32 to vector<8x64xf32>
    %23 = arith.addf %22, %21 : vector<8x64xf32>
    %24 = arith.divf %22, %23 : vector<8x64xf32>
    %25 = vector.extract_strided_slice %24 {offsets = [0, 0], sizes = [8, 32], strides = [1, 1]} : vector<8x64xf32> to vector<8x32xf32>
    %26 = vector.extract_strided_slice %24 {offsets = [0, 32], sizes = [8, 32], strides = [1, 1]} : vector<8x64xf32> to vector<8x32xf32>
    %27 = vector.extract_strided_slice %14 {offsets = [0, 64], sizes = [8, 32], strides = [1, 1]} : vector<8x96xf32> to vector<8x32xf32>
    %28 = vector.extract_strided_slice %16 {offsets = [0, 64], sizes = [8, 32], strides = [1, 1]} : vector<8x96xf32> to vector<8x32xf32>
    %29 = arith.addf %28, %5 : vector<8x32xf32>
    %30 = arith.mulf %25, %29 : vector<8x32xf32>
    %31 = arith.addf %27, %30 : vector<8x32xf32>
    %32 = math.tanh %31 : vector<8x32xf32>
    %cst_17 = arith.constant 1.000000e+00 : f32
    %33 = vector.broadcast %cst_17 : f32 to vector<8x32xf32>
    %34 = arith.subf %33, %26 : vector<8x32xf32>
    %35 = arith.mulf %34, %32 : vector<8x32xf32>
    %36 = arith.mulf %26, %12 : vector<8x32xf32>
    %37 = arith.addf %35, %36 : vector<8x32xf32>
    %38 = tpu.concatenate %37, %13 in 1 : vector<8x32xf32>, vector<8x32xf32> -> vector<8x64xf32>
    %39 = arith.truncf %38 : vector<8x64xf32> to vector<8x64xbf16>
    %cst_18 = arith.constant dense<0.000000e+00> : vector<8x128xf32>
    %40 = tpu.matmul %39, %6, %cst_18 {dimension_numbers = #tpu.dot_dimension_numbers<[1], [0], [0], [1], [0, 0, 1, 1], [], []>} : vector<8x64xbf16>, vector<64x128xbf16>, vector<8x128xf32> -> vector<8x128xf32>
    %41 = vector.broadcast %7 : vector<1x128xf32> to vector<8x128xf32>
    %42 = arith.addf %40, %41 : vector<8x128xf32>
    %43 = vector.extract_strided_slice %42 {offsets = [0, 0], sizes = [8, 64], strides = [1, 1]} : vector<8x128xf32> to vector<8x64xf32>
    %44 = arith.negf %43 : vector<8x64xf32>
    %45 = math.exp %44 : vector<8x64xf32>
    %cst_19 = arith.constant 1.000000e+00 : f32
    %46 = vector.broadcast %cst_19 : f32 to vector<8x64xf32>
    %47 = arith.addf %46, %45 : vector<8x64xf32>
    %48 = arith.divf %46, %47 : vector<8x64xf32>
    %49 = vector.extract_strided_slice %48 {offsets = [0, 0], sizes = [8, 32], strides = [1, 1]} : vector<8x64xf32> to vector<8x32xf32>
    %50 = vector.extract_strided_slice %48 {offsets = [0, 32], sizes = [8, 32], strides = [1, 1]} : vector<8x64xf32> to vector<8x32xf32>
    %51 = vector.extract_strided_slice %42 {offsets = [0, 64], sizes = [8, 32], strides = [1, 1]} : vector<8x128xf32> to vector<8x32xf32>
    %52 = vector.extract_strided_slice %42 {offsets = [0, 96], sizes = [8, 32], strides = [1, 1]} : vector<8x128xf32> to vector<8x32xf32>
    %53 = arith.mulf %49, %52 : vector<8x32xf32>
    %54 = arith.addf %51, %53 : vector<8x32xf32>
    %55 = math.tanh %54 : vector<8x32xf32>
    %cst_20 = arith.constant 1.000000e+00 : f32
    %56 = vector.broadcast %cst_20 : f32 to vector<8x32xf32>
    %57 = arith.subf %56, %50 : vector<8x32xf32>
    %58 = arith.mulf %57, %55 : vector<8x32xf32>
    %59 = arith.mulf %50, %13 : vector<8x32xf32>
    %60 = arith.addf %58, %59 : vector<8x32xf32>
    %61 = vector.extract_strided_slice %11 {offsets = [8, 0], sizes = [8, 96], strides = [1, 1]} : vector<64x96xf32> to vector<8x96xf32>
    %62 = arith.truncf %37 : vector<8x32xf32> to vector<8x32xbf16>
    %cst_21 = arith.constant dense<0.000000e+00> : vector<8x96xf32>
    %63 = tpu.matmul %62, %1, %cst_21 {dimension_numbers = #tpu.dot_dimension_numbers<[1], [0], [0], [1], [0, 0, 1, 1], [], []>} : vector<8x32xbf16>, vector<32x96xbf16>, vector<8x96xf32> -> vector<8x96xf32>
    %64 = vector.extract_strided_slice %61 {offsets = [0, 0], sizes = [8, 64], strides = [1, 1]} : vector<8x96xf32> to vector<8x64xf32>
    %65 = vector.extract_strided_slice %63 {offsets = [0, 0], sizes = [8, 64], strides = [1, 1]} : vector<8x96xf32> to vector<8x64xf32>
    %66 = arith.addf %64, %65 : vector<8x64xf32>
    %67 = arith.negf %66 : vector<8x64xf32>
    %68 = math.exp %67 : vector<8x64xf32>
    %cst_22 = arith.constant 1.000000e+00 : f32
    %69 = vector.broadcast %cst_22 : f32 to vector<8x64xf32>
    %70 = arith.addf %69, %68 : vector<8x64xf32>
    %71 = arith.divf %69, %70 : vector<8x64xf32>
    %72 = vector.extract_strided_slice %71 {offsets = [0, 0], sizes = [8, 32], strides = [1, 1]} : vector<8x64xf32> to vector<8x32xf32>
    %73 = vector.extract_strided_slice %71 {offsets = [0, 32], sizes = [8, 32], strides = [1, 1]} : vector<8x64xf32> to vector<8x32xf32>
    %74 = vector.extract_strided_slice %61 {offsets = [0, 64], sizes = [8, 32], strides = [1, 1]} : vector<8x96xf32> to vector<8x32xf32>
    %75 = vector.extract_strided_slice %63 {offsets = [0, 64], sizes = [8, 32], strides = [1, 1]} : vector<8x96xf32> to vector<8x32xf32>
    %76 = arith.addf %75, %5 : vector<8x32xf32>
    %77 = arith.mulf %72, %76 : vector<8x32xf32>
    %78 = arith.addf %74, %77 : vector<8x32xf32>
    %79 = math.tanh %78 : vector<8x32xf32>
    %cst_23 = arith.constant 1.000000e+00 : f32
    %80 = vector.broadcast %cst_23 : f32 to vector<8x32xf32>
    %81 = arith.subf %80, %73 : vector<8x32xf32>
    %82 = arith.mulf %81, %79 : vector<8x32xf32>
    %83 = arith.mulf %73, %37 : vector<8x32xf32>
    %84 = arith.addf %82, %83 : vector<8x32xf32>
    %85 = tpu.concatenate %84, %60 in 1 : vector<8x32xf32>, vector<8x32xf32> -> vector<8x64xf32>
    %86 = arith.truncf %85 : vector<8x64xf32> to vector<8x64xbf16>
    %cst_24 = arith.constant dense<0.000000e+00> : vector<8x128xf32>
    %87 = tpu.matmul %86, %6, %cst_24 {dimension_numbers = #tpu.dot_dimension_numbers<[1], [0], [0], [1], [0, 0, 1, 1], [], []>} : vector<8x64xbf16>, vector<64x128xbf16>, vector<8x128xf32> -> vector<8x128xf32>
    %88 = vector.broadcast %7 : vector<1x128xf32> to vector<8x128xf32>
    %89 = arith.addf %87, %88 : vector<8x128xf32>
    %90 = vector.extract_strided_slice %89 {offsets = [0, 0], sizes = [8, 64], strides = [1, 1]} : vector<8x128xf32> to vector<8x64xf32>
    %91 = arith.negf %90 : vector<8x64xf32>
    %92 = math.exp %91 : vector<8x64xf32>
    %cst_25 = arith.constant 1.000000e+00 : f32
    %93 = vector.broadcast %cst_25 : f32 to vector<8x64xf32>
    %94 = arith.addf %93, %92 : vector<8x64xf32>
    %95 = arith.divf %93, %94 : vector<8x64xf32>
    %96 = vector.extract_strided_slice %95 {offsets = [0, 0], sizes = [8, 32], strides = [1, 1]} : vector<8x64xf32> to vector<8x32xf32>
    %97 = vector.extract_strided_slice %95 {offsets = [0, 32], sizes = [8, 32], strides = [1, 1]} : vector<8x64xf32> to vector<8x32xf32>
    %98 = vector.extract_strided_slice %89 {offsets = [0, 64], sizes = [8, 32], strides = [1, 1]} : vector<8x128xf32> to vector<8x32xf32>
    %99 = vector.extract_strided_slice %89 {offsets = [0, 96], sizes = [8, 32], strides = [1, 1]} : vector<8x128xf32> to vector<8x32xf32>
    %100 = arith.mulf %96, %99 : vector<8x32xf32>
    %101 = arith.addf %98, %100 : vector<8x32xf32>
    %102 = math.tanh %101 : vector<8x32xf32>
    %cst_26 = arith.constant 1.000000e+00 : f32
    %103 = vector.broadcast %cst_26 : f32 to vector<8x32xf32>
    %104 = arith.subf %103, %97 : vector<8x32xf32>
    %105 = arith.mulf %104, %102 : vector<8x32xf32>
    %106 = arith.mulf %97, %60 : vector<8x32xf32>
    %107 = arith.addf %105, %106 : vector<8x32xf32>
    %108 = vector.extract_strided_slice %11 {offsets = [16, 0], sizes = [8, 96], strides = [1, 1]} : vector<64x96xf32> to vector<8x96xf32>
    %109 = arith.truncf %84 : vector<8x32xf32> to vector<8x32xbf16>
    %cst_27 = arith.constant dense<0.000000e+00> : vector<8x96xf32>
    %110 = tpu.matmul %109, %1, %cst_27 {dimension_numbers = #tpu.dot_dimension_numbers<[1], [0], [0], [1], [0, 0, 1, 1], [], []>} : vector<8x32xbf16>, vector<32x96xbf16>, vector<8x96xf32> -> vector<8x96xf32>
    %111 = vector.extract_strided_slice %108 {offsets = [0, 0], sizes = [8, 64], strides = [1, 1]} : vector<8x96xf32> to vector<8x64xf32>
    %112 = vector.extract_strided_slice %110 {offsets = [0, 0], sizes = [8, 64], strides = [1, 1]} : vector<8x96xf32> to vector<8x64xf32>
    %113 = arith.addf %111, %112 : vector<8x64xf32>
    %114 = arith.negf %113 : vector<8x64xf32>
    %115 = math.exp %114 : vector<8x64xf32>
    %cst_28 = arith.constant 1.000000e+00 : f32
    %116 = vector.broadcast %cst_28 : f32 to vector<8x64xf32>
    %117 = arith.addf %116, %115 : vector<8x64xf32>
    %118 = arith.divf %116, %117 : vector<8x64xf32>
    %119 = vector.extract_strided_slice %118 {offsets = [0, 0], sizes = [8, 32], strides = [1, 1]} : vector<8x64xf32> to vector<8x32xf32>
    %120 = vector.extract_strided_slice %118 {offsets = [0, 32], sizes = [8, 32], strides = [1, 1]} : vector<8x64xf32> to vector<8x32xf32>
    %121 = vector.extract_strided_slice %108 {offsets = [0, 64], sizes = [8, 32], strides = [1, 1]} : vector<8x96xf32> to vector<8x32xf32>
    %122 = vector.extract_strided_slice %110 {offsets = [0, 64], sizes = [8, 32], strides = [1, 1]} : vector<8x96xf32> to vector<8x32xf32>
    %123 = arith.addf %122, %5 : vector<8x32xf32>
    %124 = arith.mulf %119, %123 : vector<8x32xf32>
    %125 = arith.addf %121, %124 : vector<8x32xf32>
    %126 = math.tanh %125 : vector<8x32xf32>
    %cst_29 = arith.constant 1.000000e+00 : f32
    %127 = vector.broadcast %cst_29 : f32 to vector<8x32xf32>
    %128 = arith.subf %127, %120 : vector<8x32xf32>
    %129 = arith.mulf %128, %126 : vector<8x32xf32>
    %130 = arith.mulf %120, %84 : vector<8x32xf32>
    %131 = arith.addf %129, %130 : vector<8x32xf32>
    %132 = tpu.concatenate %131, %107 in 1 : vector<8x32xf32>, vector<8x32xf32> -> vector<8x64xf32>
    %133 = arith.truncf %132 : vector<8x64xf32> to vector<8x64xbf16>
    %cst_30 = arith.constant dense<0.000000e+00> : vector<8x128xf32>
    %134 = tpu.matmul %133, %6, %cst_30 {dimension_numbers = #tpu.dot_dimension_numbers<[1], [0], [0], [1], [0, 0, 1, 1], [], []>} : vector<8x64xbf16>, vector<64x128xbf16>, vector<8x128xf32> -> vector<8x128xf32>
    %135 = vector.broadcast %7 : vector<1x128xf32> to vector<8x128xf32>
    %136 = arith.addf %134, %135 : vector<8x128xf32>
    %137 = vector.extract_strided_slice %136 {offsets = [0, 0], sizes = [8, 64], strides = [1, 1]} : vector<8x128xf32> to vector<8x64xf32>
    %138 = arith.negf %137 : vector<8x64xf32>
    %139 = math.exp %138 : vector<8x64xf32>
    %cst_31 = arith.constant 1.000000e+00 : f32
    %140 = vector.broadcast %cst_31 : f32 to vector<8x64xf32>
    %141 = arith.addf %140, %139 : vector<8x64xf32>
    %142 = arith.divf %140, %141 : vector<8x64xf32>
    %143 = vector.extract_strided_slice %142 {offsets = [0, 0], sizes = [8, 32], strides = [1, 1]} : vector<8x64xf32> to vector<8x32xf32>
    %144 = vector.extract_strided_slice %142 {offsets = [0, 32], sizes = [8, 32], strides = [1, 1]} : vector<8x64xf32> to vector<8x32xf32>
    %145 = vector.extract_strided_slice %136 {offsets = [0, 64], sizes = [8, 32], strides = [1, 1]} : vector<8x128xf32> to vector<8x32xf32>
    %146 = vector.extract_strided_slice %136 {offsets = [0, 96], sizes = [8, 32], strides = [1, 1]} : vector<8x128xf32> to vector<8x32xf32>
    %147 = arith.mulf %143, %146 : vector<8x32xf32>
    %148 = arith.addf %145, %147 : vector<8x32xf32>
    %149 = math.tanh %148 : vector<8x32xf32>
    %cst_32 = arith.constant 1.000000e+00 : f32
    %150 = vector.broadcast %cst_32 : f32 to vector<8x32xf32>
    %151 = arith.subf %150, %144 : vector<8x32xf32>
    %152 = arith.mulf %151, %149 : vector<8x32xf32>
    %153 = arith.mulf %144, %107 : vector<8x32xf32>
    %154 = arith.addf %152, %153 : vector<8x32xf32>
    %155 = vector.extract_strided_slice %11 {offsets = [24, 0], sizes = [8, 96], strides = [1, 1]} : vector<64x96xf32> to vector<8x96xf32>
    %156 = arith.truncf %131 : vector<8x32xf32> to vector<8x32xbf16>
    %cst_33 = arith.constant dense<0.000000e+00> : vector<8x96xf32>
    %157 = tpu.matmul %156, %1, %cst_33 {dimension_numbers = #tpu.dot_dimension_numbers<[1], [0], [0], [1], [0, 0, 1, 1], [], []>} : vector<8x32xbf16>, vector<32x96xbf16>, vector<8x96xf32> -> vector<8x96xf32>
    %158 = vector.extract_strided_slice %155 {offsets = [0, 0], sizes = [8, 64], strides = [1, 1]} : vector<8x96xf32> to vector<8x64xf32>
    %159 = vector.extract_strided_slice %157 {offsets = [0, 0], sizes = [8, 64], strides = [1, 1]} : vector<8x96xf32> to vector<8x64xf32>
    %160 = arith.addf %158, %159 : vector<8x64xf32>
    %161 = arith.negf %160 : vector<8x64xf32>
    %162 = math.exp %161 : vector<8x64xf32>
    %cst_34 = arith.constant 1.000000e+00 : f32
    %163 = vector.broadcast %cst_34 : f32 to vector<8x64xf32>
    %164 = arith.addf %163, %162 : vector<8x64xf32>
    %165 = arith.divf %163, %164 : vector<8x64xf32>
    %166 = vector.extract_strided_slice %165 {offsets = [0, 0], sizes = [8, 32], strides = [1, 1]} : vector<8x64xf32> to vector<8x32xf32>
    %167 = vector.extract_strided_slice %165 {offsets = [0, 32], sizes = [8, 32], strides = [1, 1]} : vector<8x64xf32> to vector<8x32xf32>
    %168 = vector.extract_strided_slice %155 {offsets = [0, 64], sizes = [8, 32], strides = [1, 1]} : vector<8x96xf32> to vector<8x32xf32>
    %169 = vector.extract_strided_slice %157 {offsets = [0, 64], sizes = [8, 32], strides = [1, 1]} : vector<8x96xf32> to vector<8x32xf32>
    %170 = arith.addf %169, %5 : vector<8x32xf32>
    %171 = arith.mulf %166, %170 : vector<8x32xf32>
    %172 = arith.addf %168, %171 : vector<8x32xf32>
    %173 = math.tanh %172 : vector<8x32xf32>
    %cst_35 = arith.constant 1.000000e+00 : f32
    %174 = vector.broadcast %cst_35 : f32 to vector<8x32xf32>
    %175 = arith.subf %174, %167 : vector<8x32xf32>
    %176 = arith.mulf %175, %173 : vector<8x32xf32>
    %177 = arith.mulf %167, %131 : vector<8x32xf32>
    %178 = arith.addf %176, %177 : vector<8x32xf32>
    %179 = tpu.concatenate %178, %154 in 1 : vector<8x32xf32>, vector<8x32xf32> -> vector<8x64xf32>
    %180 = arith.truncf %179 : vector<8x64xf32> to vector<8x64xbf16>
    %cst_36 = arith.constant dense<0.000000e+00> : vector<8x128xf32>
    %181 = tpu.matmul %180, %6, %cst_36 {dimension_numbers = #tpu.dot_dimension_numbers<[1], [0], [0], [1], [0, 0, 1, 1], [], []>} : vector<8x64xbf16>, vector<64x128xbf16>, vector<8x128xf32> -> vector<8x128xf32>
    %182 = vector.broadcast %7 : vector<1x128xf32> to vector<8x128xf32>
    %183 = arith.addf %181, %182 : vector<8x128xf32>
    %184 = vector.extract_strided_slice %183 {offsets = [0, 0], sizes = [8, 64], strides = [1, 1]} : vector<8x128xf32> to vector<8x64xf32>
    %185 = arith.negf %184 : vector<8x64xf32>
    %186 = math.exp %185 : vector<8x64xf32>
    %cst_37 = arith.constant 1.000000e+00 : f32
    %187 = vector.broadcast %cst_37 : f32 to vector<8x64xf32>
    %188 = arith.addf %187, %186 : vector<8x64xf32>
    %189 = arith.divf %187, %188 : vector<8x64xf32>
    %190 = vector.extract_strided_slice %189 {offsets = [0, 0], sizes = [8, 32], strides = [1, 1]} : vector<8x64xf32> to vector<8x32xf32>
    %191 = vector.extract_strided_slice %189 {offsets = [0, 32], sizes = [8, 32], strides = [1, 1]} : vector<8x64xf32> to vector<8x32xf32>
    %192 = vector.extract_strided_slice %183 {offsets = [0, 64], sizes = [8, 32], strides = [1, 1]} : vector<8x128xf32> to vector<8x32xf32>
    %193 = vector.extract_strided_slice %183 {offsets = [0, 96], sizes = [8, 32], strides = [1, 1]} : vector<8x128xf32> to vector<8x32xf32>
    %194 = arith.mulf %190, %193 : vector<8x32xf32>
    %195 = arith.addf %192, %194 : vector<8x32xf32>
    %196 = math.tanh %195 : vector<8x32xf32>
    %cst_38 = arith.constant 1.000000e+00 : f32
    %197 = vector.broadcast %cst_38 : f32 to vector<8x32xf32>
    %198 = arith.subf %197, %191 : vector<8x32xf32>
    %199 = arith.mulf %198, %196 : vector<8x32xf32>
    %200 = arith.mulf %191, %154 : vector<8x32xf32>
    %201 = arith.addf %199, %200 : vector<8x32xf32>
    %202 = vector.extract_strided_slice %11 {offsets = [32, 0], sizes = [8, 96], strides = [1, 1]} : vector<64x96xf32> to vector<8x96xf32>
    %203 = arith.truncf %178 : vector<8x32xf32> to vector<8x32xbf16>
    %cst_39 = arith.constant dense<0.000000e+00> : vector<8x96xf32>
    %204 = tpu.matmul %203, %1, %cst_39 {dimension_numbers = #tpu.dot_dimension_numbers<[1], [0], [0], [1], [0, 0, 1, 1], [], []>} : vector<8x32xbf16>, vector<32x96xbf16>, vector<8x96xf32> -> vector<8x96xf32>
    %205 = vector.extract_strided_slice %202 {offsets = [0, 0], sizes = [8, 64], strides = [1, 1]} : vector<8x96xf32> to vector<8x64xf32>
    %206 = vector.extract_strided_slice %204 {offsets = [0, 0], sizes = [8, 64], strides = [1, 1]} : vector<8x96xf32> to vector<8x64xf32>
    %207 = arith.addf %205, %206 : vector<8x64xf32>
    %208 = arith.negf %207 : vector<8x64xf32>
    %209 = math.exp %208 : vector<8x64xf32>
    %cst_40 = arith.constant 1.000000e+00 : f32
    %210 = vector.broadcast %cst_40 : f32 to vector<8x64xf32>
    %211 = arith.addf %210, %209 : vector<8x64xf32>
    %212 = arith.divf %210, %211 : vector<8x64xf32>
    %213 = vector.extract_strided_slice %212 {offsets = [0, 0], sizes = [8, 32], strides = [1, 1]} : vector<8x64xf32> to vector<8x32xf32>
    %214 = vector.extract_strided_slice %212 {offsets = [0, 32], sizes = [8, 32], strides = [1, 1]} : vector<8x64xf32> to vector<8x32xf32>
    %215 = vector.extract_strided_slice %202 {offsets = [0, 64], sizes = [8, 32], strides = [1, 1]} : vector<8x96xf32> to vector<8x32xf32>
    %216 = vector.extract_strided_slice %204 {offsets = [0, 64], sizes = [8, 32], strides = [1, 1]} : vector<8x96xf32> to vector<8x32xf32>
    %217 = arith.addf %216, %5 : vector<8x32xf32>
    %218 = arith.mulf %213, %217 : vector<8x32xf32>
    %219 = arith.addf %215, %218 : vector<8x32xf32>
    %220 = math.tanh %219 : vector<8x32xf32>
    %cst_41 = arith.constant 1.000000e+00 : f32
    %221 = vector.broadcast %cst_41 : f32 to vector<8x32xf32>
    %222 = arith.subf %221, %214 : vector<8x32xf32>
    %223 = arith.mulf %222, %220 : vector<8x32xf32>
    %224 = arith.mulf %214, %178 : vector<8x32xf32>
    %225 = arith.addf %223, %224 : vector<8x32xf32>
    %226 = tpu.concatenate %225, %201 in 1 : vector<8x32xf32>, vector<8x32xf32> -> vector<8x64xf32>
    %227 = arith.truncf %226 : vector<8x64xf32> to vector<8x64xbf16>
    %cst_42 = arith.constant dense<0.000000e+00> : vector<8x128xf32>
    %228 = tpu.matmul %227, %6, %cst_42 {dimension_numbers = #tpu.dot_dimension_numbers<[1], [0], [0], [1], [0, 0, 1, 1], [], []>} : vector<8x64xbf16>, vector<64x128xbf16>, vector<8x128xf32> -> vector<8x128xf32>
    %229 = vector.broadcast %7 : vector<1x128xf32> to vector<8x128xf32>
    %230 = arith.addf %228, %229 : vector<8x128xf32>
    %231 = vector.extract_strided_slice %230 {offsets = [0, 0], sizes = [8, 64], strides = [1, 1]} : vector<8x128xf32> to vector<8x64xf32>
    %232 = arith.negf %231 : vector<8x64xf32>
    %233 = math.exp %232 : vector<8x64xf32>
    %cst_43 = arith.constant 1.000000e+00 : f32
    %234 = vector.broadcast %cst_43 : f32 to vector<8x64xf32>
    %235 = arith.addf %234, %233 : vector<8x64xf32>
    %236 = arith.divf %234, %235 : vector<8x64xf32>
    %237 = vector.extract_strided_slice %236 {offsets = [0, 0], sizes = [8, 32], strides = [1, 1]} : vector<8x64xf32> to vector<8x32xf32>
    %238 = vector.extract_strided_slice %236 {offsets = [0, 32], sizes = [8, 32], strides = [1, 1]} : vector<8x64xf32> to vector<8x32xf32>
    %239 = vector.extract_strided_slice %230 {offsets = [0, 64], sizes = [8, 32], strides = [1, 1]} : vector<8x128xf32> to vector<8x32xf32>
    %240 = vector.extract_strided_slice %230 {offsets = [0, 96], sizes = [8, 32], strides = [1, 1]} : vector<8x128xf32> to vector<8x32xf32>
    %241 = arith.mulf %237, %240 : vector<8x32xf32>
    %242 = arith.addf %239, %241 : vector<8x32xf32>
    %243 = math.tanh %242 : vector<8x32xf32>
    %cst_44 = arith.constant 1.000000e+00 : f32
    %244 = vector.broadcast %cst_44 : f32 to vector<8x32xf32>
    %245 = arith.subf %244, %238 : vector<8x32xf32>
    %246 = arith.mulf %245, %243 : vector<8x32xf32>
    %247 = arith.mulf %238, %201 : vector<8x32xf32>
    %248 = arith.addf %246, %247 : vector<8x32xf32>
    %249 = vector.extract_strided_slice %11 {offsets = [40, 0], sizes = [8, 96], strides = [1, 1]} : vector<64x96xf32> to vector<8x96xf32>
    %250 = arith.truncf %225 : vector<8x32xf32> to vector<8x32xbf16>
    %cst_45 = arith.constant dense<0.000000e+00> : vector<8x96xf32>
    %251 = tpu.matmul %250, %1, %cst_45 {dimension_numbers = #tpu.dot_dimension_numbers<[1], [0], [0], [1], [0, 0, 1, 1], [], []>} : vector<8x32xbf16>, vector<32x96xbf16>, vector<8x96xf32> -> vector<8x96xf32>
    %252 = vector.extract_strided_slice %249 {offsets = [0, 0], sizes = [8, 64], strides = [1, 1]} : vector<8x96xf32> to vector<8x64xf32>
    %253 = vector.extract_strided_slice %251 {offsets = [0, 0], sizes = [8, 64], strides = [1, 1]} : vector<8x96xf32> to vector<8x64xf32>
    %254 = arith.addf %252, %253 : vector<8x64xf32>
    %255 = arith.negf %254 : vector<8x64xf32>
    %256 = math.exp %255 : vector<8x64xf32>
    %cst_46 = arith.constant 1.000000e+00 : f32
    %257 = vector.broadcast %cst_46 : f32 to vector<8x64xf32>
    %258 = arith.addf %257, %256 : vector<8x64xf32>
    %259 = arith.divf %257, %258 : vector<8x64xf32>
    %260 = vector.extract_strided_slice %259 {offsets = [0, 0], sizes = [8, 32], strides = [1, 1]} : vector<8x64xf32> to vector<8x32xf32>
    %261 = vector.extract_strided_slice %259 {offsets = [0, 32], sizes = [8, 32], strides = [1, 1]} : vector<8x64xf32> to vector<8x32xf32>
    %262 = vector.extract_strided_slice %249 {offsets = [0, 64], sizes = [8, 32], strides = [1, 1]} : vector<8x96xf32> to vector<8x32xf32>
    %263 = vector.extract_strided_slice %251 {offsets = [0, 64], sizes = [8, 32], strides = [1, 1]} : vector<8x96xf32> to vector<8x32xf32>
    %264 = arith.addf %263, %5 : vector<8x32xf32>
    %265 = arith.mulf %260, %264 : vector<8x32xf32>
    %266 = arith.addf %262, %265 : vector<8x32xf32>
    %267 = math.tanh %266 : vector<8x32xf32>
    %cst_47 = arith.constant 1.000000e+00 : f32
    %268 = vector.broadcast %cst_47 : f32 to vector<8x32xf32>
    %269 = arith.subf %268, %261 : vector<8x32xf32>
    %270 = arith.mulf %269, %267 : vector<8x32xf32>
    %271 = arith.mulf %261, %225 : vector<8x32xf32>
    %272 = arith.addf %270, %271 : vector<8x32xf32>
    %273 = tpu.concatenate %272, %248 in 1 : vector<8x32xf32>, vector<8x32xf32> -> vector<8x64xf32>
    %274 = arith.truncf %273 : vector<8x64xf32> to vector<8x64xbf16>
    %cst_48 = arith.constant dense<0.000000e+00> : vector<8x128xf32>
    %275 = tpu.matmul %274, %6, %cst_48 {dimension_numbers = #tpu.dot_dimension_numbers<[1], [0], [0], [1], [0, 0, 1, 1], [], []>} : vector<8x64xbf16>, vector<64x128xbf16>, vector<8x128xf32> -> vector<8x128xf32>
    %276 = vector.broadcast %7 : vector<1x128xf32> to vector<8x128xf32>
    %277 = arith.addf %275, %276 : vector<8x128xf32>
    %278 = vector.extract_strided_slice %277 {offsets = [0, 0], sizes = [8, 64], strides = [1, 1]} : vector<8x128xf32> to vector<8x64xf32>
    %279 = arith.negf %278 : vector<8x64xf32>
    %280 = math.exp %279 : vector<8x64xf32>
    %cst_49 = arith.constant 1.000000e+00 : f32
    %281 = vector.broadcast %cst_49 : f32 to vector<8x64xf32>
    %282 = arith.addf %281, %280 : vector<8x64xf32>
    %283 = arith.divf %281, %282 : vector<8x64xf32>
    %284 = vector.extract_strided_slice %283 {offsets = [0, 0], sizes = [8, 32], strides = [1, 1]} : vector<8x64xf32> to vector<8x32xf32>
    %285 = vector.extract_strided_slice %283 {offsets = [0, 32], sizes = [8, 32], strides = [1, 1]} : vector<8x64xf32> to vector<8x32xf32>
    %286 = vector.extract_strided_slice %277 {offsets = [0, 64], sizes = [8, 32], strides = [1, 1]} : vector<8x128xf32> to vector<8x32xf32>
    %287 = vector.extract_strided_slice %277 {offsets = [0, 96], sizes = [8, 32], strides = [1, 1]} : vector<8x128xf32> to vector<8x32xf32>
    %288 = arith.mulf %284, %287 : vector<8x32xf32>
    %289 = arith.addf %286, %288 : vector<8x32xf32>
    %290 = math.tanh %289 : vector<8x32xf32>
    %cst_50 = arith.constant 1.000000e+00 : f32
    %291 = vector.broadcast %cst_50 : f32 to vector<8x32xf32>
    %292 = arith.subf %291, %285 : vector<8x32xf32>
    %293 = arith.mulf %292, %290 : vector<8x32xf32>
    %294 = arith.mulf %285, %248 : vector<8x32xf32>
    %295 = arith.addf %293, %294 : vector<8x32xf32>
    %296 = vector.extract_strided_slice %11 {offsets = [48, 0], sizes = [8, 96], strides = [1, 1]} : vector<64x96xf32> to vector<8x96xf32>
    %297 = arith.truncf %272 : vector<8x32xf32> to vector<8x32xbf16>
    %cst_51 = arith.constant dense<0.000000e+00> : vector<8x96xf32>
    %298 = tpu.matmul %297, %1, %cst_51 {dimension_numbers = #tpu.dot_dimension_numbers<[1], [0], [0], [1], [0, 0, 1, 1], [], []>} : vector<8x32xbf16>, vector<32x96xbf16>, vector<8x96xf32> -> vector<8x96xf32>
    %299 = vector.extract_strided_slice %296 {offsets = [0, 0], sizes = [8, 64], strides = [1, 1]} : vector<8x96xf32> to vector<8x64xf32>
    %300 = vector.extract_strided_slice %298 {offsets = [0, 0], sizes = [8, 64], strides = [1, 1]} : vector<8x96xf32> to vector<8x64xf32>
    %301 = arith.addf %299, %300 : vector<8x64xf32>
    %302 = arith.negf %301 : vector<8x64xf32>
    %303 = math.exp %302 : vector<8x64xf32>
    %cst_52 = arith.constant 1.000000e+00 : f32
    %304 = vector.broadcast %cst_52 : f32 to vector<8x64xf32>
    %305 = arith.addf %304, %303 : vector<8x64xf32>
    %306 = arith.divf %304, %305 : vector<8x64xf32>
    %307 = vector.extract_strided_slice %306 {offsets = [0, 0], sizes = [8, 32], strides = [1, 1]} : vector<8x64xf32> to vector<8x32xf32>
    %308 = vector.extract_strided_slice %306 {offsets = [0, 32], sizes = [8, 32], strides = [1, 1]} : vector<8x64xf32> to vector<8x32xf32>
    %309 = vector.extract_strided_slice %296 {offsets = [0, 64], sizes = [8, 32], strides = [1, 1]} : vector<8x96xf32> to vector<8x32xf32>
    %310 = vector.extract_strided_slice %298 {offsets = [0, 64], sizes = [8, 32], strides = [1, 1]} : vector<8x96xf32> to vector<8x32xf32>
    %311 = arith.addf %310, %5 : vector<8x32xf32>
    %312 = arith.mulf %307, %311 : vector<8x32xf32>
    %313 = arith.addf %309, %312 : vector<8x32xf32>
    %314 = math.tanh %313 : vector<8x32xf32>
    %cst_53 = arith.constant 1.000000e+00 : f32
    %315 = vector.broadcast %cst_53 : f32 to vector<8x32xf32>
    %316 = arith.subf %315, %308 : vector<8x32xf32>
    %317 = arith.mulf %316, %314 : vector<8x32xf32>
    %318 = arith.mulf %308, %272 : vector<8x32xf32>
    %319 = arith.addf %317, %318 : vector<8x32xf32>
    %320 = tpu.concatenate %319, %295 in 1 : vector<8x32xf32>, vector<8x32xf32> -> vector<8x64xf32>
    %321 = arith.truncf %320 : vector<8x64xf32> to vector<8x64xbf16>
    %cst_54 = arith.constant dense<0.000000e+00> : vector<8x128xf32>
    %322 = tpu.matmul %321, %6, %cst_54 {dimension_numbers = #tpu.dot_dimension_numbers<[1], [0], [0], [1], [0, 0, 1, 1], [], []>} : vector<8x64xbf16>, vector<64x128xbf16>, vector<8x128xf32> -> vector<8x128xf32>
    %323 = vector.broadcast %7 : vector<1x128xf32> to vector<8x128xf32>
    %324 = arith.addf %322, %323 : vector<8x128xf32>
    %325 = vector.extract_strided_slice %324 {offsets = [0, 0], sizes = [8, 64], strides = [1, 1]} : vector<8x128xf32> to vector<8x64xf32>
    %326 = arith.negf %325 : vector<8x64xf32>
    %327 = math.exp %326 : vector<8x64xf32>
    %cst_55 = arith.constant 1.000000e+00 : f32
    %328 = vector.broadcast %cst_55 : f32 to vector<8x64xf32>
    %329 = arith.addf %328, %327 : vector<8x64xf32>
    %330 = arith.divf %328, %329 : vector<8x64xf32>
    %331 = vector.extract_strided_slice %330 {offsets = [0, 0], sizes = [8, 32], strides = [1, 1]} : vector<8x64xf32> to vector<8x32xf32>
    %332 = vector.extract_strided_slice %330 {offsets = [0, 32], sizes = [8, 32], strides = [1, 1]} : vector<8x64xf32> to vector<8x32xf32>
    %333 = vector.extract_strided_slice %324 {offsets = [0, 64], sizes = [8, 32], strides = [1, 1]} : vector<8x128xf32> to vector<8x32xf32>
    %334 = vector.extract_strided_slice %324 {offsets = [0, 96], sizes = [8, 32], strides = [1, 1]} : vector<8x128xf32> to vector<8x32xf32>
    %335 = arith.mulf %331, %334 : vector<8x32xf32>
    %336 = arith.addf %333, %335 : vector<8x32xf32>
    %337 = math.tanh %336 : vector<8x32xf32>
    %cst_56 = arith.constant 1.000000e+00 : f32
    %338 = vector.broadcast %cst_56 : f32 to vector<8x32xf32>
    %339 = arith.subf %338, %332 : vector<8x32xf32>
    %340 = arith.mulf %339, %337 : vector<8x32xf32>
    %341 = arith.mulf %332, %295 : vector<8x32xf32>
    %342 = arith.addf %340, %341 : vector<8x32xf32>
    %343 = vector.extract_strided_slice %11 {offsets = [56, 0], sizes = [8, 96], strides = [1, 1]} : vector<64x96xf32> to vector<8x96xf32>
    %344 = arith.truncf %319 : vector<8x32xf32> to vector<8x32xbf16>
    %cst_57 = arith.constant dense<0.000000e+00> : vector<8x96xf32>
    %345 = tpu.matmul %344, %1, %cst_57 {dimension_numbers = #tpu.dot_dimension_numbers<[1], [0], [0], [1], [0, 0, 1, 1], [], []>} : vector<8x32xbf16>, vector<32x96xbf16>, vector<8x96xf32> -> vector<8x96xf32>
    %346 = vector.extract_strided_slice %343 {offsets = [0, 0], sizes = [8, 64], strides = [1, 1]} : vector<8x96xf32> to vector<8x64xf32>
    %347 = vector.extract_strided_slice %345 {offsets = [0, 0], sizes = [8, 64], strides = [1, 1]} : vector<8x96xf32> to vector<8x64xf32>
    %348 = arith.addf %346, %347 : vector<8x64xf32>
    %349 = arith.negf %348 : vector<8x64xf32>
    %350 = math.exp %349 : vector<8x64xf32>
    %cst_58 = arith.constant 1.000000e+00 : f32
    %351 = vector.broadcast %cst_58 : f32 to vector<8x64xf32>
    %352 = arith.addf %351, %350 : vector<8x64xf32>
    %353 = arith.divf %351, %352 : vector<8x64xf32>
    %354 = vector.extract_strided_slice %353 {offsets = [0, 0], sizes = [8, 32], strides = [1, 1]} : vector<8x64xf32> to vector<8x32xf32>
    %355 = vector.extract_strided_slice %353 {offsets = [0, 32], sizes = [8, 32], strides = [1, 1]} : vector<8x64xf32> to vector<8x32xf32>
    %356 = vector.extract_strided_slice %343 {offsets = [0, 64], sizes = [8, 32], strides = [1, 1]} : vector<8x96xf32> to vector<8x32xf32>
    %357 = vector.extract_strided_slice %345 {offsets = [0, 64], sizes = [8, 32], strides = [1, 1]} : vector<8x96xf32> to vector<8x32xf32>
    %358 = arith.addf %357, %5 : vector<8x32xf32>
    %359 = arith.mulf %354, %358 : vector<8x32xf32>
    %360 = arith.addf %356, %359 : vector<8x32xf32>
    %361 = math.tanh %360 : vector<8x32xf32>
    %cst_59 = arith.constant 1.000000e+00 : f32
    %362 = vector.broadcast %cst_59 : f32 to vector<8x32xf32>
    %363 = arith.subf %362, %355 : vector<8x32xf32>
    %364 = arith.mulf %363, %361 : vector<8x32xf32>
    %365 = arith.mulf %355, %319 : vector<8x32xf32>
    %366 = arith.addf %364, %365 : vector<8x32xf32>
    %367 = tpu.concatenate %366, %342 in 1 : vector<8x32xf32>, vector<8x32xf32> -> vector<8x64xf32>
    %368 = arith.truncf %367 : vector<8x64xf32> to vector<8x64xbf16>
    %cst_60 = arith.constant dense<0.000000e+00> : vector<8x128xf32>
    %369 = tpu.matmul %368, %6, %cst_60 {dimension_numbers = #tpu.dot_dimension_numbers<[1], [0], [0], [1], [0, 0, 1, 1], [], []>} : vector<8x64xbf16>, vector<64x128xbf16>, vector<8x128xf32> -> vector<8x128xf32>
    %370 = vector.broadcast %7 : vector<1x128xf32> to vector<8x128xf32>
    %371 = arith.addf %369, %370 : vector<8x128xf32>
    %372 = vector.extract_strided_slice %371 {offsets = [0, 0], sizes = [8, 64], strides = [1, 1]} : vector<8x128xf32> to vector<8x64xf32>
    %373 = arith.negf %372 : vector<8x64xf32>
    %374 = math.exp %373 : vector<8x64xf32>
    %cst_61 = arith.constant 1.000000e+00 : f32
    %375 = vector.broadcast %cst_61 : f32 to vector<8x64xf32>
    %376 = arith.addf %375, %374 : vector<8x64xf32>
    %377 = arith.divf %375, %376 : vector<8x64xf32>
    %378 = vector.extract_strided_slice %377 {offsets = [0, 0], sizes = [8, 32], strides = [1, 1]} : vector<8x64xf32> to vector<8x32xf32>
    %379 = vector.extract_strided_slice %377 {offsets = [0, 32], sizes = [8, 32], strides = [1, 1]} : vector<8x64xf32> to vector<8x32xf32>
    %380 = vector.extract_strided_slice %371 {offsets = [0, 64], sizes = [8, 32], strides = [1, 1]} : vector<8x128xf32> to vector<8x32xf32>
    %381 = vector.extract_strided_slice %371 {offsets = [0, 96], sizes = [8, 32], strides = [1, 1]} : vector<8x128xf32> to vector<8x32xf32>
    %382 = arith.mulf %378, %381 : vector<8x32xf32>
    %383 = arith.addf %380, %382 : vector<8x32xf32>
    %384 = math.tanh %383 : vector<8x32xf32>
    %cst_62 = arith.constant 1.000000e+00 : f32
    %385 = vector.broadcast %cst_62 : f32 to vector<8x32xf32>
    %386 = arith.subf %385, %379 : vector<8x32xf32>
    %387 = arith.mulf %386, %384 : vector<8x32xf32>
    %388 = arith.mulf %379, %342 : vector<8x32xf32>
    %389 = arith.addf %387, %388 : vector<8x32xf32>
    %cst_63 = arith.constant dense<0.000000e+00> : vector<8xf32>
    %390 = vector.multi_reduction <add>, %389, %cst_63 [1] : vector<8x32xf32> to vector<8xf32>
    %391 = vector.shape_cast %390 : vector<8xf32> to vector<8x1xf32>
    %cst_64 = arith.constant 3.200000e+01 : f32
    %392 = vector.broadcast %cst_64 : f32 to vector<8x1xf32>
    %393 = arith.divf %391, %392 : vector<8x1xf32>
    %394 = vector.broadcast %393 : vector<8x1xf32> to vector<8x32xf32>
    %395 = arith.subf %389, %394 : vector<8x32xf32>
    %396 = arith.mulf %395, %395 : vector<8x32xf32>
    %cst_65 = arith.constant dense<0.000000e+00> : vector<8xf32>
    %397 = vector.multi_reduction <add>, %396, %cst_65 [1] : vector<8x32xf32> to vector<8xf32>
    %398 = vector.shape_cast %397 : vector<8xf32> to vector<8x1xf32>
    %cst_66 = arith.constant 3.200000e+01 : f32
    %399 = vector.broadcast %cst_66 : f32 to vector<8x1xf32>
    %400 = arith.divf %398, %399 : vector<8x1xf32>
    %401 = vector.broadcast %393 : vector<8x1xf32> to vector<8x32xf32>
    %402 = arith.subf %389, %401 : vector<8x32xf32>
    %cst_67 = arith.constant 9.99999974E-6 : f32
    %403 = vector.broadcast %cst_67 : f32 to vector<8x1xf32>
    %404 = arith.addf %400, %403 : vector<8x1xf32>
    %405 = math.rsqrt %404 : vector<8x1xf32>
    %406 = vector.broadcast %405 : vector<8x1xf32> to vector<8x32xf32>
    %407 = arith.mulf %402, %406 : vector<8x32xf32>
    %c0_68 = arith.constant 0 : index
    %c0_69 = arith.constant 0 : index
    %408 = vector.load %arg7[%c0_68, %c0_69] : memref<1x32xf32, #tpu.memory_space<vmem>>, vector<1x32xf32>
    %409 = vector.broadcast %408 : vector<1x32xf32> to vector<8x32xf32>
    %410 = arith.mulf %407, %409 : vector<8x32xf32>
    %c0_70 = arith.constant 0 : index
    %c0_71 = arith.constant 0 : index
    %411 = vector.load %arg8[%c0_70, %c0_71] : memref<1x32xf32, #tpu.memory_space<vmem>>, vector<1x32xf32>
    %412 = vector.broadcast %411 : vector<1x32xf32> to vector<8x32xf32>
    %413 = arith.addf %410, %412 : vector<8x32xf32>
    %c0_72 = arith.constant 0 : index
    %c0_73 = arith.constant 0 : index
    %414 = vector.load %arg9[%c0_72, %c0_73] : memref<32x16xf32, #tpu.memory_space<vmem>>, vector<32x16xf32>
    %cst_74 = arith.constant dense<0.000000e+00> : vector<8x16xf32>
    %415 = tpu.matmul %413, %414, %cst_74 {dimension_numbers = #tpu.dot_dimension_numbers<[1], [0], [0], [1], [0, 0, 1, 1], [], []>} : vector<8x32xf32>, vector<32x16xf32>, vector<8x16xf32> -> vector<8x16xf32>
    %c0_75 = arith.constant 0 : index
    %c0_76 = arith.constant 0 : index
    %416 = vector.load %arg10[%c0_75, %c0_76] : memref<1x16xf32, #tpu.memory_space<vmem>>, vector<1x16xf32>
    %417 = vector.broadcast %416 : vector<1x16xf32> to vector<8x16xf32>
    %418 = arith.addf %415, %417 : vector<8x16xf32>
    %cst_77 = arith.constant 0.000000e+00 : f32
    %419 = vector.broadcast %cst_77 : f32 to vector<8x16xf32>
    %420 = arith.maximumf %418, %419 : vector<8x16xf32>
    %c0_78 = arith.constant 0 : index
    %c0_79 = arith.constant 0 : index
    %421 = vector.load %arg11[%c0_78, %c0_79] : memref<16x1xf32, #tpu.memory_space<vmem>>, vector<16x1xf32>
    %cst_80 = arith.constant dense<0.000000e+00> : vector<8x1xf32>
    %422 = tpu.matmul %420, %421, %cst_80 {dimension_numbers = #tpu.dot_dimension_numbers<[1], [0], [0], [1], [0, 0, 1, 1], [], []>} : vector<8x16xf32>, vector<16x1xf32>, vector<8x1xf32> -> vector<8x1xf32>
    %c0_81 = arith.constant 0 : index
    %c0_82 = arith.constant 0 : index
    %423 = vector.load %arg12[%c0_81, %c0_82] : memref<1x1xf32, #tpu.memory_space<vmem>>, vector<1x1xf32>
    %424 = vector.broadcast %423 : vector<1x1xf32> to vector<8x1xf32>
    %425 = arith.addf %422, %424 : vector<8x1xf32>
    %c0_83 = arith.constant 0 : index
    %c0_84 = arith.constant 0 : index
    %426 = vector.load %arg13[%c0_83, %c0_84] : memref<8x1xf32, #tpu.memory_space<vmem>>, vector<8x1xf32>
    tpu.vector_store %arg13[%c0_83, %c0_84], %425 {strides = array<i32>} : memref<8x1xf32, #tpu.memory_space<vmem>>, vector<8x1xf32>,
    return
  }
}

</mosaic_0001>

<llo_original>
// kernel: tpu_custom_call.1
$region0: #{tpu_custom_call.1}
  #allocation0 [shape = 'u32[]', space=smem, size = 0x4, offset = 0x4, fixed_abs, tag = 'smem constant byte address 0x4 - core index']
  #allocation1 [shape = 'u32[144,128]{1,0:T(1,128)}', space=vmem, size = 0x12000, scoped, tag = 'internal scratch']
  #allocation2 [shape = 'f32[1,1]{1,0:T(1,128)S(1)}', space=vmem, size = 0x200, scoped, tag = 'scoped memory for tpu_custom_call.1']
  %s0 = inlined_call_operand.vmem [shape: bf16[64,6], index: 0, kind: input, shape index: {}]
  %s1 = inlined_call_operand.vmem [shape: bf16[6,96], index: 1, kind: input, shape index: {}]
  %s2 = inlined_call_operand.vmem [shape: bf16[32,96], index: 2, kind: input, shape index: {}]
  %s3 = inlined_call_operand.vmem [shape: f32[1,96], index: 3, kind: input, shape index: {}]
  %s4 = inlined_call_operand.vmem [shape: f32[1,32], index: 4, kind: input, shape index: {}]
  %s5 = inlined_call_operand.vmem [shape: bf16[64,128], index: 5, kind: input, shape index: {}]
  %s6 = inlined_call_operand.vmem [shape: f32[1,128], index: 6, kind: input, shape index: {}]
  %s7 = inlined_call_operand.vmem [shape: f32[1,32], index: 7, kind: input, shape index: {}]
  %s8 = inlined_call_operand.vmem [shape: f32[1,32], index: 8, kind: input, shape index: {}]
  %s9 = inlined_call_operand.vmem [shape: f32[32,16], index: 9, kind: input, shape index: {}]
  %s10 = inlined_call_operand.vmem [shape: f32[1,16], index: 10, kind: input, shape index: {}]
  %s11 = inlined_call_operand.vmem [shape: f32[16,1], index: 11, kind: input, shape index: {}]
  %s12 = inlined_call_operand.<no memory space> [shape: f32[1,1], index: 12, kind: input, shape index: {}]
  %s13 = inlined_call_operand.vmem [shape: f32[8,1], index: 13, kind: output, shape index: {}]
  %s14 = sld [smem:[#allocation0]]
  $region62: #{tpu_custom_call.1} parent=0
    _
  %s16 = ssub.s32 1, %s14
  %s17 = scalar_select 0, %s16, %s14
  %v18 = vstv %s12
  %19 = vst [vmem:[#allocation2] sm:$0x1] %v18
  // Predicated region
  $region2: #{tpu_custom_call.1} parent=0 // pred_check
    _
  $region3: #{tpu_custom_call.1} parent=0 // pred_check_branch
    %21 = sbr.rel (0) target = $region5
  $region4: #{tpu_custom_call.1} parent=0 // pred_region
    _
  $region5: #{tpu_custom_call.1} parent=0 // pred_fallthru
    _
  // Predicated region
  $region6: #{tpu_custom_call.1} parent=0 // pred_check
    _
  $region7: #{tpu_custom_call.1} parent=0 // pred_check_branch
    %23 = sbr.rel (0) target = $region9
  $region8: #{tpu_custom_call.1} parent=0 // pred_region
    _
  $region9: #{tpu_custom_call.1} parent=0 // pred_fallthru
    _
  // Predicated region
  $region10: #{tpu_custom_call.1} parent=0 // pred_check
    _
  $region11: #{tpu_custom_call.1} parent=0 // pred_check_branch
    %25 = sbr.rel (0) target = $region13
  $region12: #{tpu_custom_call.1} parent=0 // pred_region
    _
  $region13: #{tpu_custom_call.1} parent=0 // pred_fallthru
    _
  // Predicated region
  $region14: #{tpu_custom_call.1} parent=0 // pred_check
    _
  $region15: #{tpu_custom_call.1} parent=0 // pred_check_branch
    %27 = sbr.rel (0) target = $region17
  $region16: #{tpu_custom_call.1} parent=0 // pred_region
    _
  $region17: #{tpu_custom_call.1} parent=0 // pred_fallthru
    _
  // Predicated region
  $region18: #{tpu_custom_call.1} parent=0 // pred_check
    _
  $region19: #{tpu_custom_call.1} parent=0 // pred_check_branch
    %29 = sbr.rel (0) target = $region21
  $region20: #{tpu_custom_call.1} parent=0 // pred_region
    _
  $region21: #{tpu_custom_call.1} parent=0 // pred_fallthru
    _
  // Predicated region
  $region22: #{tpu_custom_call.1} parent=0 // pred_check
    _
  $region23: #{tpu_custom_call.1} parent=0 // pred_check_branch
    %31 = sbr.rel (0) target = $region25
  $region24: #{tpu_custom_call.1} parent=0 // pred_region
    _
  $region25: #{tpu_custom_call.1} parent=0 // pred_fallthru
    _
  // Predicated region
  $region26: #{tpu_custom_call.1} parent=0 // pred_check
    _
  $region27: #{tpu_custom_call.1} parent=0 // pred_check_branch
    %33 = sbr.rel (0) target = $region29
  $region28: #{tpu_custom_call.1} parent=0 // pred_region
    _
  $region29: #{tpu_custom_call.1} parent=0 // pred_fallthru
    _
  // Predicated region
  $region30: #{tpu_custom_call.1} parent=0 // pred_check
    _
  $region31: #{tpu_custom_call.1} parent=0 // pred_check_branch
    %35 = sbr.rel (0) target = $region33
  $region32: #{tpu_custom_call.1} parent=0 // pred_region
    _
  $region33: #{tpu_custom_call.1} parent=0 // pred_fallthru
    _
  // Predicated region
  $region34: #{tpu_custom_call.1} parent=0 // pred_check
    _
  $region35: #{tpu_custom_call.1} parent=0 // pred_check_branch
    %37 = sbr.rel (0) target = $region37
  $region36: #{tpu_custom_call.1} parent=0 // pred_region
    _
  $region37: #{tpu_custom_call.1} parent=0 // pred_fallthru
    _
  // Predicated region
  $region38: #{tpu_custom_call.1} parent=0 // pred_check
    _
  $region39: #{tpu_custom_call.1} parent=0 // pred_check_branch
    %39 = sbr.rel (0) target = $region41
  $region40: #{tpu_custom_call.1} parent=0 // pred_region
    _
  $region41: #{tpu_custom_call.1} parent=0 // pred_fallthru
    _
  // Predicated region
  $region42: #{tpu_custom_call.1} parent=0 // pred_check
    _
  $region43: #{tpu_custom_call.1} parent=0 // pred_check_branch
    %41 = sbr.rel (0) target = $region45
  $region44: #{tpu_custom_call.1} parent=0 // pred_region
    _
  $region45: #{tpu_custom_call.1} parent=0 // pred_fallthru
    _
  // Predicated region
  $region46: #{tpu_custom_call.1} parent=0 // pred_check
    _
  $region47: #{tpu_custom_call.1} parent=0 // pred_check_branch
    %43 = sbr.rel (0) target = $region49
  $region48: #{tpu_custom_call.1} parent=0 // pred_region
    _
  $region49: #{tpu_custom_call.1} parent=0 // pred_fallthru
    _
  // Predicated region
  $region50: #{tpu_custom_call.1} parent=0 // pred_check
    _
  $region51: #{tpu_custom_call.1} parent=0 // pred_check_branch
    %45 = sbr.rel (0) target = $region53
  $region52: #{tpu_custom_call.1} parent=0 // pred_region
    _
  $region53: #{tpu_custom_call.1} parent=0 // pred_fallthru
    _
  %v47 = vld [vmem:[%s1] sm:$0x7]
  %v48 = vld [vmem:[%s2] sm:$0xf]
  %v49 = vld [vmem:[%s2 + $0x4] sm:$0xf]
  %v50 = vld [vmem:[%s2 + $0x8] sm:$0xf]
  %v51 = vld [vmem:[%s2 + $0xc] sm:$0xf]
  %v52 = vld [vmem:[%s3] sm:$0x1]
  %v53 = vld [vmem:[%s4] sm:$0x1]
  %v55 = vlaneseq
  %v56 = vshrl.u32 %v55, 7
  %v57 = vsub.s32 0, %v56
  %v58 = vrot.slane %v53, %v57
  %v59 = vld [vmem:[%s5] sm:$0xf]
  %v60 = vld [vmem:[%s5 + $0x4] sm:$0xf]
  %v61 = vld [vmem:[%s5 + $0x8] sm:$0xf]
  %v62 = vld [vmem:[%s5 + $0xc] sm:$0xf]
  %v63 = vld [vmem:[%s5 + $0x10] sm:$0xf]
  %v64 = vld [vmem:[%s5 + $0x14] sm:$0xf]
  %v65 = vld [vmem:[%s5 + $0x18] sm:$0xf]
  %v66 = vld [vmem:[%s5 + $0x1c] sm:$0xf]
  %v67 = vld [vmem:[%s6] sm:$0x1]
  %v68 = vld [vmem:[%s0] sm:$0xf]
  %v69 = vld [vmem:[%s0 + $0x4] sm:$0xf]
  %v70 = vld [vmem:[%s0 + $0x8] sm:$0xf]
  %v71 = vld [vmem:[%s0 + $0xc] sm:$0xf]
  %v72 = vld [vmem:[%s0 + $0x10] sm:$0xf]
  %v73 = vld [vmem:[%s0 + $0x14] sm:$0xf]
  %v74 = vld [vmem:[%s0 + $0x18] sm:$0xf]
  %v75 = vld [vmem:[%s0 + $0x1c] sm:$0xf]
  %v77 = vlaneseq
  %v78 = vshrl.u32 %v77, 7
  %v79 = vsub.s32 0, %v78
  %v80 = vrot.slane %v52, %v79
  %v90 = vunpack.c.l.b16 %v68
  %v91 = vunpack.c.l.b16 %v69
  %v92 = vunpack.c.l.b16 %v70
  %v93 = vunpack.c.l.b16 %v71
  %v94 = vunpack.c.l.b16 %v72
  %v95 = vunpack.c.l.b16 %v73
  %v96 = vunpack.c.l.b16 %v74
  %v97 = vunpack.c.l.b16 %v75
  %v98 = vpack.c.b16 %v91, %v90
  %v99 = vpack.c.b16 %v93, %v92
  %v100 = vpack.c.b16 %v95, %v94
  %v101 = vpack.c.b16 %v97, %v96
  %vm102 = vcmask 48128
  %v104 = vsel %vm102, %v98, 0
  %v107 = vsel %vm102, %v99, 0
  %v110 = vsel %vm102, %v100, 0
  %v113 = vsel %vm102, %v101, 0
  %vm115 = vcmask 1042432
  %v117 = vsel %vm115, %v47, 0
  %119 = vmatprep.subr.bf16.mxu0 0
  %120 = vmatpush1.bf16.msra.mxu0 %v117
  %121 = vmatprep.subr.bf16.mxu0 0
  %122 = vmatpush1.bf16.msra.mxu0 0
  %123 = vmatprep.subr.bf16.mxu0 0
  %124 = vmatpush1.bf16.msra.mxu0 0
  %125 = vmatprep.subr.bf16.mxu0 0
  %126 = vmatpush1.bf16.msra.mxu0 0
  %127 = vmatprep.subr.bf16.mxu0 0
  %128 = vmatpush1.bf16.msra.mxu0 0
  %129 = vmatprep.subr.bf16.mxu0 0
  %130 = vmatpush1.bf16.msra.mxu0 0
  %131 = vmatprep.subr.bf16.mxu0 0
  %132 = vmatpush1.bf16.msra.mxu0 0
  %133 = vmatprep.subr.bf16.mxu0 0
  %134 = vmatpush1.bf16.msra.mxu0 0
  %135 = vmatprep.subr.bf16.mxu0 0
  %136 = vmatpush1.bf16.msra.mxu0 0
  %137 = vmatprep.subr.bf16.mxu0 0
  %138 = vmatpush1.bf16.msra.mxu0 0
  %139 = vmatprep.subr.bf16.mxu0 0
  %140 = vmatpush1.bf16.msra.mxu0 0
  %141 = vmatprep.subr.bf16.mxu0 0
  %142 = vmatpush1.bf16.msra.mxu0 0
  %143 = vmatprep.subr.bf16.mxu0 0
  %144 = vmatpush1.bf16.msra.mxu0 0
  %145 = vmatprep.subr.bf16.mxu0 0
  %146 = vmatpush1.bf16.msra.mxu0 0
  %147 = vmatprep.subr.bf16.mxu0 0
  %148 = vmatpush1.bf16.msra.mxu0 0
  %149 = vmatprep.subr.bf16.mxu0 0
  %150 = vmatpush1.bf16.msra.mxu0 0
  %151 = vmatprep.mubr.bf16.mxu0 0
  %152 = vmatmul.mubr.bf16.gmra.mrb[0].mxu0 %v104
  %v153 = vpop.f32.mrb[0].mxu0
  %v154 = vadd.f32 %v80, %v153
  %v155 = vpop.f32.mrb[0].mxu0
  %v156 = vpop.f32.mrb[0].mxu0
  %v157 = vadd.f32 %v80, %v156
  %v158 = vpop.f32.mrb[0].mxu0
  %159 = vmatprep.mubr.bf16.mxu0 0
  %160 = vmatmul.mubr.bf16.gmra.mrb[0].mxu0 %v107
  %v161 = vpop.f32.mrb[0].mxu0
  %v162 = vadd.f32 %v80, %v161
  %v163 = vpop.f32.mrb[0].mxu0
  %v164 = vpop.f32.mrb[0].mxu0
  %v165 = vadd.f32 %v80, %v164
  %v166 = vpop.f32.mrb[0].mxu0
  %167 = vmatprep.mubr.bf16.mxu0 0
  %168 = vmatmul.mubr.bf16.gmra.mrb[0].mxu0 %v110
  %v169 = vpop.f32.mrb[0].mxu0
  %v170 = vadd.f32 %v80, %v169
  %v171 = vpop.f32.mrb[0].mxu0
  %v172 = vpop.f32.mrb[0].mxu0
  %v173 = vadd.f32 %v80, %v172
  %v174 = vpop.f32.mrb[0].mxu0
  %175 = vmatprep.mubr.bf16.mxu0 0
  %176 = vmatmul.mubr.bf16.gmra.mrb[0].mxu0 %v113
  %v177 = vpop.f32.mrb[0].mxu0
  %v178 = vadd.f32 %v80, %v177
  %v179 = vpop.f32.mrb[0].mxu0
  %v180 = vpop.f32.mrb[0].mxu0
  %v181 = vadd.f32 %v80, %v180
  %v182 = vpop.f32.mrb[0].mxu0
  %183 = vdwg.mxu0
  %v188 = vunpack.c.l.b16 %v48
  %v189 = vunpack.c.l.b16 %v49
  %v190 = vunpack.c.l.b16 %v50
  %v191 = vunpack.c.l.b16 %v51
  %v192 = vpack.c.b16 %v189, %v188
  %v193 = vpack.c.b16 %v191, %v190
  %vm196 = vcmask 261120
  %v198 = vsel %vm196, 0, 0
  %200 = vmatprep.subr.bf16.mxu0 0
  %201 = vmatpush1.bf16.msra.mxu0 %v192
  %202 = vmatprep.subr.bf16.mxu0 0
  %203 = vmatpush1.bf16.msra.mxu0 %v193
  %204 = vmatprep.subr.bf16.mxu0 0
  %205 = vmatpush1.bf16.msra.mxu0 0
  %206 = vmatprep.subr.bf16.mxu0 0
  %207 = vmatpush1.bf16.msra.mxu0 0
  %208 = vmatprep.subr.bf16.mxu0 0
  %209 = vmatpush1.bf16.msra.mxu0 0
  %210 = vmatprep.subr.bf16.mxu0 0
  %211 = vmatpush1.bf16.msra.mxu0 0
  %212 = vmatprep.subr.bf16.mxu0 0
  %213 = vmatpush1.bf16.msra.mxu0 0
  %214 = vmatprep.subr.bf16.mxu0 0
  %215 = vmatpush1.bf16.msra.mxu0 0
  %216 = vmatprep.subr.bf16.mxu0 0
  %217 = vmatpush1.bf16.msra.mxu0 0
  %218 = vmatprep.subr.bf16.mxu0 0
  %219 = vmatpush1.bf16.msra.mxu0 0
  %220 = vmatprep.subr.bf16.mxu0 0
  %221 = vmatpush1.bf16.msra.mxu0 0
  %222 = vmatprep.subr.bf16.mxu0 0
  %223 = vmatpush1.bf16.msra.mxu0 0
  %224 = vmatprep.subr.bf16.mxu0 0
  %225 = vmatpush1.bf16.msra.mxu0 0
  %226 = vmatprep.subr.bf16.mxu0 0
  %227 = vmatpush1.bf16.msra.mxu0 0
  %228 = vmatprep.subr.bf16.mxu0 0
  %229 = vmatpush1.bf16.msra.mxu0 0
  %230 = vmatprep.subr.bf16.mxu0 0
  %231 = vmatpush1.bf16.msra.mxu0 0
  %232 = vmatprep.mubr.bf16.mxu0 0
  %233 = vmatmul.mubr.bf16.gmra.mrb[0].mxu0 %v198
  %v234 = vpop.f32.mrb[0].mxu0
  %v235 = vadd.f32 0.0, %v234
  %v236 = vpop.f32.mrb[0].mxu0
  %v237 = vpop.f32.mrb[0].mxu0
  %v238 = vpop.f32.mrb[0].mxu0
  %239 = vdwg.mxu0
  %v240 = vadd.f32 %v154, %v235
  %v241 = vxor.u32 %v240, 2147483648
  %v242 = vmul.f32 %v241, 1.442695
  %v243 = vpow.pop %v242
  %v244 = vadd.f32 %v243, 1.0
  %v245 = vrcp.pop %v244
  %v246 = vmul.f32 1.0, %v245
  %247 = vrot.lane.b32.xlu0 %v58, 64
  %v248 = vpop.permute.xlu0 %247
  %v250 = vadd.f32 %v235, %v248
  %252 = vrot.lane.b32.xlu0 %v250, 64
  %v253 = vpop.permute.xlu0 %252
  %v255 = vmul.f32 %v246, %v253
  %257 = vrot.lane.b32.xlu0 %v255, 64
  %v258 = vpop.permute.xlu0 %257
  %v260 = vadd.f32 %v154, %v258
  %v261 = vtanh.pop %v260
  %v262 = vsub.f32 1.0, %v246
  %264 = vrot.lane.b32.xlu0 %v261, 96
  %v265 = vpop.permute.xlu0 %264
  %v267 = vmul.f32 %v262, %v265
  %v268 = vmul.f32 %v246, 0.0
  %v269 = vadd.f32 %v267, %v268
  %271 = vrot.lane.b32.xlu0 %v269, 96
  %v272 = vpop.permute.xlu0 %271
  %v274 = vsel %vm196, %v272, 0.0
  %v275 = vpack.c.bf16 %v274, %v274
  %v277 = vlaneseq
  %v278 = vshrl.u32 %v277, 7
  %v279 = vsub.s32 0, %v278
  %v280 = vrot.slane %v67, %v279
  %v290 = vunpack.c.l.b16 %v59
  %v291 = vunpack.c.l.b16 %v60
  %v292 = vunpack.c.l.b16 %v61
  %v293 = vunpack.c.l.b16 %v62
  %v294 = vunpack.c.l.b16 %v63
  %v295 = vunpack.c.l.b16 %v64
  %v296 = vunpack.c.l.b16 %v65
  %v297 = vunpack.c.l.b16 %v66
  %v298 = vpack.c.b16 %v291, %v290
  %v299 = vpack.c.b16 %v293, %v292
  %v300 = vpack.c.b16 %v295, %v294
  %v301 = vpack.c.b16 %v297, %v296
  %vm306 = vcmask 523264
  %v308 = vsel %vm306, %v275, 0
  %310 = vmatprep.subr.bf16.mxu0 0
  %311 = vmatpush1.bf16.msra.mxu0 %v298
  %312 = vmatprep.subr.bf16.mxu0 0
  %313 = vmatpush1.bf16.msra.mxu0 %v299
  %314 = vmatprep.subr.bf16.mxu0 0
  %315 = vmatpush1.bf16.msra.mxu0 %v300
  %316 = vmatprep.subr.bf16.mxu0 0
  %317 = vmatpush1.bf16.msra.mxu0 %v301
  %318 = vmatprep.subr.bf16.mxu0 0
  %319 = vmatpush1.bf16.msra.mxu0 0
  %320 = vmatprep.subr.bf16.mxu0 0
  %321 = vmatpush1.bf16.msra.mxu0 0
  %322 = vmatprep.subr.bf16.mxu0 0
  %323 = vmatpush1.bf16.msra.mxu0 0
  %324 = vmatprep.subr.bf16.mxu0 0
  %325 = vmatpush1.bf16.msra.mxu0 0
  %326 = vmatprep.subr.bf16.mxu0 0
  %327 = vmatpush1.bf16.msra.mxu0 0
  %328 = vmatprep.subr.bf16.mxu0 0
  %329 = vmatpush1.bf16.msra.mxu0 0
  %330 = vmatprep.subr.bf16.mxu0 0
  %331 = vmatpush1.bf16.msra.mxu0 0
  %332 = vmatprep.subr.bf16.mxu0 0
  %333 = vmatpush1.bf16.msra.mxu0 0
  %334 = vmatprep.subr.bf16.mxu0 0
  %335 = vmatpush1.bf16.msra.mxu0 0
  %336 = vmatprep.subr.bf16.mxu0 0
  %337 = vmatpush1.bf16.msra.mxu0 0
  %338 = vmatprep.subr.bf16.mxu0 0
  %339 = vmatpush1.bf16.msra.mxu0 0
  %340 = vmatprep.subr.bf16.mxu0 0
  %341 = vmatpush1.bf16.msra.mxu0 0
  %342 = vmatprep.mubr.bf16.mxu0 0
  %343 = vmatmul.mubr.bf16.gmra.mrb[0].mxu0 %v308
  %v344 = vpop.f32.mrb[0].mxu0
  %v345 = vadd.f32 %v280, %v344
  %v346 = vpop.f32.mrb[0].mxu0
  %v347 = vpop.f32.mrb[0].mxu0
  %v348 = vpop.f32.mrb[0].mxu0
  %349 = vdwg.mxu0
  %v350 = vxor.u32 %v345, 2147483648
  %v351 = vmul.f32 %v350, 1.442695
  %v352 = vpow.pop %v351
  %v353 = vadd.f32 %v352, 1.0
  %v354 = vrcp.pop %v353
  %v355 = vmul.f32 1.0, %v354
  %357 = vrot.lane.b32.xlu0 %v345, 32
  %v358 = vpop.permute.xlu0 %357
  %v360 = vmul.f32 %v355, %v358
  %362 = vrot.lane.b32.xlu0 %v360, 64
  %v363 = vpop.permute.xlu0 %362
  %v365 = vadd.f32 %v345, %v363
  %v366 = vtanh.pop %v365
  %v367 = vsub.f32 1.0, %v355
  %369 = vrot.lane.b32.xlu0 %v366, 96
  %v370 = vpop.permute.xlu0 %369
  %v372 = vmul.f32 %v367, %v370
  %v373 = vmul.f32 %v355, 0.0
  %v374 = vadd.f32 %v372, %v373
  %v375 = vpack.c.bf16 %v269, %v269
  %377 = vrot.lane.b32.xlu0 %v375, 96
  %v378 = vpop.permute.xlu0 %377
  %v380 = vsel %vm196, %v378, 0
  %382 = vmatprep.subr.bf16.mxu0 0
  %383 = vmatpush1.bf16.msra.mxu0 %v192
  %384 = vmatprep.subr.bf16.mxu0 0
  %385 = vmatpush1.bf16.msra.mxu0 %v193
  %386 = vmatprep.subr.bf16.mxu0 0
  %387 = vmatpush1.bf16.msra.mxu0 0
  %388 = vmatprep.subr.bf16.mxu0 0
  %389 = vmatpush1.bf16.msra.mxu0 0
  %390 = vmatprep.subr.bf16.mxu0 0
  %391 = vmatpush1.bf16.msra.mxu0 0
  %392 = vmatprep.subr.bf16.mxu0 0
  %393 = vmatpush1.bf16.msra.mxu0 0
  %394 = vmatprep.subr.bf16.mxu0 0
  %395 = vmatpush1.bf16.msra.mxu0 0
  %396 = vmatprep.subr.bf16.mxu0 0
  %397 = vmatpush1.bf16.msra.mxu0 0
  %398 = vmatprep.subr.bf16.mxu0 0
  %399 = vmatpush1.bf16.msra.mxu0 0
  %400 = vmatprep.subr.bf16.mxu0 0
  %401 = vmatpush1.bf16.msra.mxu0 0
  %402 = vmatprep.subr.bf16.mxu0 0
  %403 = vmatpush1.bf16.msra.mxu0 0
  %404 = vmatprep.subr.bf16.mxu0 0
  %405 = vmatpush1.bf16.msra.mxu0 0
  %406 = vmatprep.subr.bf16.mxu0 0
  %407 = vmatpush1.bf16.msra.mxu0 0
  %408 = vmatprep.subr.bf16.mxu0 0
  %409 = vmatpush1.bf16.msra.mxu0 0
  %410 = vmatprep.subr.bf16.mxu0 0
  %411 = vmatpush1.bf16.msra.mxu0 0
  %412 = vmatprep.subr.bf16.mxu0 0
  %413 = vmatpush1.bf16.msra.mxu0 0
  %414 = vmatprep.mubr.bf16.mxu0 0
  %415 = vmatmul.mubr.bf16.gmra.mrb[0].mxu0 %v380
  %v416 = vpop.f32.mrb[0].mxu0
  %v417 = vadd.f32 0.0, %v416
  %v418 = vpop.f32.mrb[0].mxu0
  %v419 = vpop.f32.mrb[0].mxu0
  %v420 = vpop.f32.mrb[0].mxu0
  %421 = vdwg.mxu0
  %v422 = vadd.f32 %v157, %v417
  %v423 = vxor.u32 %v422, 2147483648
  %v424 = vmul.f32 %v423, 1.442695
  %v425 = vpow.pop %v424
  %v426 = vadd.f32 %v425, 1.0
  %v427 = vrcp.pop %v426
  %v428 = vmul.f32 1.0, %v427
  %v429 = vadd.f32 %v417, %v248
  %431 = vrot.lane.b32.xlu0 %v429, 64
  %v432 = vpop.permute.xlu0 %431
  %v434 = vmul.f32 %v428, %v432
  %436 = vrot.lane.b32.xlu0 %v434, 64
  %v437 = vpop.permute.xlu0 %436
  %v439 = vadd.f32 %v157, %v437
  %v440 = vtanh.pop %v439
  %v441 = vsub.f32 1.0, %v428
  %443 = vrot.lane.b32.xlu0 %v440, 96
  %v444 = vpop.permute.xlu0 %443
  %v446 = vmul.f32 %v441, %v444
  %v447 = vmul.f32 %v428, %v269
  %v448 = vadd.f32 %v446, %v447
  %450 = vrot.lane.b32.xlu0 %v448, 96
  %v451 = vpop.permute.xlu0 %450
  %v453 = vsel %vm196, %v451, %v374
  %v454 = vpack.c.bf16 %v453, %v453
  %v456 = vsel %vm306, %v454, 0
  %458 = vmatprep.subr.bf16.mxu0 0
  %459 = vmatpush1.bf16.msra.mxu0 %v298
  %460 = vmatprep.subr.bf16.mxu0 0
  %461 = vmatpush1.bf16.msra.mxu0 %v299
  %462 = vmatprep.subr.bf16.mxu0 0
  %463 = vmatpush1.bf16.msra.mxu0 %v300
  %464 = vmatprep.subr.bf16.mxu0 0
  %465 = vmatpush1.bf16.msra.mxu0 %v301
  %466 = vmatprep.subr.bf16.mxu0 0
  %467 = vmatpush1.bf16.msra.mxu0 0
  %468 = vmatprep.subr.bf16.mxu0 0
  %469 = vmatpush1.bf16.msra.mxu0 0
  %470 = vmatprep.subr.bf16.mxu0 0
  %471 = vmatpush1.bf16.msra.mxu0 0
  %472 = vmatprep.subr.bf16.mxu0 0
  %473 = vmatpush1.bf16.msra.mxu0 0
  %474 = vmatprep.subr.bf16.mxu0 0
  %475 = vmatpush1.bf16.msra.mxu0 0
  %476 = vmatprep.subr.bf16.mxu0 0
  %477 = vmatpush1.bf16.msra.mxu0 0
  %478 = vmatprep.subr.bf16.mxu0 0
  %479 = vmatpush1.bf16.msra.mxu0 0
  %480 = vmatprep.subr.bf16.mxu0 0
  %481 = vmatpush1.bf16.msra.mxu0 0
  %482 = vmatprep.subr.bf16.mxu0 0
  %483 = vmatpush1.bf16.msra.mxu0 0
  %484 = vmatprep.subr.bf16.mxu0 0
  %485 = vmatpush1.bf16.msra.mxu0 0
  %486 = vmatprep.subr.bf16.mxu0 0
  %487 = vmatpush1.bf16.msra.mxu0 0
  %488 = vmatprep.subr.bf16.mxu0 0
  %489 = vmatpush1.bf16.msra.mxu0 0
  %490 = vmatprep.mubr.bf16.mxu0 0
  %491 = vmatmul.mubr.bf16.gmra.mrb[0].mxu0 %v456
  %v492 = vpop.f32.mrb[0].mxu0
  %v493 = vadd.f32 %v280, %v492
  %v494 = vpop.f32.mrb[0].mxu0
  %v495 = vpop.f32.mrb[0].mxu0
  %v496 = vpop.f32.mrb[0].mxu0
  %497 = vdwg.mxu0
  %v498 = vxor.u32 %v493, 2147483648
  %v499 = vmul.f32 %v498, 1.442695
  %v500 = vpow.pop %v499
  %v501 = vadd.f32 %v500, 1.0
  %v502 = vrcp.pop %v501
  %v503 = vmul.f32 1.0, %v502
  %505 = vrot.lane.b32.xlu0 %v493, 32
  %v506 = vpop.permute.xlu0 %505
  %v508 = vmul.f32 %v503, %v506
  %510 = vrot.lane.b32.xlu0 %v508, 64
  %v511 = vpop.permute.xlu0 %510
  %v513 = vadd.f32 %v493, %v511
  %v514 = vtanh.pop %v513
  %v515 = vsub.f32 1.0, %v503
  %517 = vrot.lane.b32.xlu0 %v514, 96
  %v518 = vpop.permute.xlu0 %517
  %v520 = vmul.f32 %v515, %v518
  %v521 = vmul.f32 %v503, %v374
  %v522 = vadd.f32 %v520, %v521
  %v523 = vpack.c.bf16 %v448, %v448
  %525 = vrot.lane.b32.xlu0 %v523, 96
  %v526 = vpop.permute.xlu0 %525
  %v528 = vsel %vm196, %v526, 0
  %530 = vmatprep.subr.bf16.mxu0 0
  %531 = vmatpush1.bf16.msra.mxu0 %v192
  %532 = vmatprep.subr.bf16.mxu0 0
  %533 = vmatpush1.bf16.msra.mxu0 %v193
  %534 = vmatprep.subr.bf16.mxu0 0
  %535 = vmatpush1.bf16.msra.mxu0 0
  %536 = vmatprep.subr.bf16.mxu0 0
  %537 = vmatpush1.bf16.msra.mxu0 0
  %538 = vmatprep.subr.bf16.mxu0 0
  %539 = vmatpush1.bf16.msra.mxu0 0
  %540 = vmatprep.subr.bf16.mxu0 0
  %541 = vmatpush1.bf16.msra.mxu0 0
  %542 = vmatprep.subr.bf16.mxu0 0
  %543 = vmatpush1.bf16.msra.mxu0 0
  %544 = vmatprep.subr.bf16.mxu0 0
  %545 = vmatpush1.bf16.msra.mxu0 0
  %546 = vmatprep.subr.bf16.mxu0 0
  %547 = vmatpush1.bf16.msra.mxu0 0
  %548 = vmatprep.subr.bf16.mxu0 0
  %549 = vmatpush1.bf16.msra.mxu0 0
  %550 = vmatprep.subr.bf16.mxu0 0
  %551 = vmatpush1.bf16.msra.mxu0 0
  %552 = vmatprep.subr.bf16.mxu0 0
  %553 = vmatpush1.bf16.msra.mxu0 0
  %554 = vmatprep.subr.bf16.mxu0 0
  %555 = vmatpush1.bf16.msra.mxu0 0
  %556 = vmatprep.subr.bf16.mxu0 0
  %557 = vmatpush1.bf16.msra.mxu0 0
  %558 = vmatprep.subr.bf16.mxu0 0
  %559 = vmatpush1.bf16.msra.mxu0 0
  %560 = vmatprep.subr.bf16.mxu0 0
  %561 = vmatpush1.bf16.msra.mxu0 0
  %562 = vmatprep.mubr.bf16.mxu0 0
  %563 = vmatmul.mubr.bf16.gmra.mrb[0].mxu0 %v528
  %v564 = vpop.f32.mrb[0].mxu0
  %v565 = vadd.f32 0.0, %v564
  %v566 = vpop.f32.mrb[0].mxu0
  %v567 = vpop.f32.mrb[0].mxu0
  %v568 = vpop.f32.mrb[0].mxu0
  %569 = vdwg.mxu0
  %v570 = vadd.f32 %v162, %v565
  %v571 = vxor.u32 %v570, 2147483648
  %v572 = vmul.f32 %v571, 1.442695
  %v573 = vpow.pop %v572
  %v574 = vadd.f32 %v573, 1.0
  %v575 = vrcp.pop %v574
  %v576 = vmul.f32 1.0, %v575
  %v577 = vadd.f32 %v565, %v248
  %579 = vrot.lane.b32.xlu0 %v577, 64
  %v580 = vpop.permute.xlu0 %579
  %v582 = vmul.f32 %v576, %v580
  %584 = vrot.lane.b32.xlu0 %v582, 64
  %v585 = vpop.permute.xlu0 %584
  %v587 = vadd.f32 %v162, %v585
  %v588 = vtanh.pop %v587
  %v589 = vsub.f32 1.0, %v576
  %591 = vrot.lane.b32.xlu0 %v588, 96
  %v592 = vpop.permute.xlu0 %591
  %v594 = vmul.f32 %v589, %v592
  %v595 = vmul.f32 %v576, %v448
  %v596 = vadd.f32 %v594, %v595
  %598 = vrot.lane.b32.xlu0 %v596, 96
  %v599 = vpop.permute.xlu0 %598
  %v601 = vsel %vm196, %v599, %v522
  %v602 = vpack.c.bf16 %v601, %v601
  %v604 = vsel %vm306, %v602, 0
  %606 = vmatprep.subr.bf16.mxu0 0
  %607 = vmatpush1.bf16.msra.mxu0 %v298
  %608 = vmatprep.subr.bf16.mxu0 0
  %609 = vmatpush1.bf16.msra.mxu0 %v299
  %610 = vmatprep.subr.bf16.mxu0 0
  %611 = vmatpush1.bf16.msra.mxu0 %v300
  %612 = vmatprep.subr.bf16.mxu0 0
  %613 = vmatpush1.bf16.msra.mxu0 %v301
  %614 = vmatprep.subr.bf16.mxu0 0
  %615 = vmatpush1.bf16.msra.mxu0 0
  %616 = vmatprep.subr.bf16.mxu0 0
  %617 = vmatpush1.bf16.msra.mxu0 0
  %618 = vmatprep.subr.bf16.mxu0 0
  %619 = vmatpush1.bf16.msra.mxu0 0
  %620 = vmatprep.subr.bf16.mxu0 0
  %621 = vmatpush1.bf16.msra.mxu0 0
  %622 = vmatprep.subr.bf16.mxu0 0
  %623 = vmatpush1.bf16.msra.mxu0 0
  %624 = vmatprep.subr.bf16.mxu0 0
  %625 = vmatpush1.bf16.msra.mxu0 0
  %626 = vmatprep.subr.bf16.mxu0 0
  %627 = vmatpush1.bf16.msra.mxu0 0
  %628 = vmatprep.subr.bf16.mxu0 0
  %629 = vmatpush1.bf16.msra.mxu0 0
  %630 = vmatprep.subr.bf16.mxu0 0
  %631 = vmatpush1.bf16.msra.mxu0 0
  %632 = vmatprep.subr.bf16.mxu0 0
  %633 = vmatpush1.bf16.msra.mxu0 0
  %634 = vmatprep.subr.bf16.mxu0 0
  %635 = vmatpush1.bf16.msra.mxu0 0
  %636 = vmatprep.subr.bf16.mxu0 0
  %637 = vmatpush1.bf16.msra.mxu0 0
  %638 = vmatprep.mubr.bf16.mxu0 0
  %639 = vmatmul.mubr.bf16.gmra.mrb[0].mxu0 %v604
  %v640 = vpop.f32.mrb[0].mxu0
  %v641 = vadd.f32 %v280, %v640
  %v642 = vpop.f32.mrb[0].mxu0
  %v643 = vpop.f32.mrb[0].mxu0
  %v644 = vpop.f32.mrb[0].mxu0
  %645 = vdwg.mxu0
  %v646 = vxor.u32 %v641, 2147483648
  %v647 = vmul.f32 %v646, 1.442695
  %v648 = vpow.pop %v647
  %v649 = vadd.f32 %v648, 1.0
  %v650 = vrcp.pop %v649
  %v651 = vmul.f32 1.0, %v650
  %653 = vrot.lane.b32.xlu0 %v641, 32
  %v654 = vpop.permute.xlu0 %653
  %v656 = vmul.f32 %v651, %v654
  %658 = vrot.lane.b32.xlu0 %v656, 64
  %v659 = vpop.permute.xlu0 %658
  %v661 = vadd.f32 %v641, %v659
  %v662 = vtanh.pop %v661
  %v663 = vsub.f32 1.0, %v651
  %665 = vrot.lane.b32.xlu0 %v662, 96
  %v666 = vpop.permute.xlu0 %665
  %v668 = vmul.f32 %v663, %v666
  %v669 = vmul.f32 %v651, %v522
  %v670 = vadd.f32 %v668, %v669
  %v671 = vpack.c.bf16 %v596, %v596
  %673 = vrot.lane.b32.xlu0 %v671, 96
  %v674 = vpop.permute.xlu0 %673
  %v676 = vsel %vm196, %v674, 0
  %678 = vmatprep.subr.bf16.mxu0 0
  %679 = vmatpush1.bf16.msra.mxu0 %v192
  %680 = vmatprep.subr.bf16.mxu0 0
  %681 = vmatpush1.bf16.msra.mxu0 %v193
  %682 = vmatprep.subr.bf16.mxu0 0
  %683 = vmatpush1.bf16.msra.mxu0 0
  %684 = vmatprep.subr.bf16.mxu0 0
  %685 = vmatpush1.bf16.msra.mxu0 0
  %686 = vmatprep.subr.bf16.mxu0 0
  %687 = vmatpush1.bf16.msra.mxu0 0
  %688 = vmatprep.subr.bf16.mxu0 0
  %689 = vmatpush1.bf16.msra.mxu0 0
  %690 = vmatprep.subr.bf16.mxu0 0
  %691 = vmatpush1.bf16.msra.mxu0 0
  %692 = vmatprep.subr.bf16.mxu0 0
  %693 = vmatpush1.bf16.msra.mxu0 0
  %694 = vmatprep.subr.bf16.mxu0 0
  %695 = vmatpush1.bf16.msra.mxu0 0
  %696 = vmatprep.subr.bf16.mxu0 0
  %697 = vmatpush1.bf16.msra.mxu0 0
  %698 = vmatprep.subr.bf16.mxu0 0
  %699 = vmatpush1.bf16.msra.mxu0 0
  %700 = vmatprep.subr.bf16.mxu0 0
  %701 = vmatpush1.bf16.msra.mxu0 0
  %702 = vmatprep.subr.bf16.mxu0 0
  %703 = vmatpush1.bf16.msra.mxu0 0
  %704 = vmatprep.subr.bf16.mxu0 0
  %705 = vmatpush1.bf16.msra.mxu0 0
  %706 = vmatprep.subr.bf16.mxu0 0
  %707 = vmatpush1.bf16.msra.mxu0 0
  %708 = vmatprep.subr.bf16.mxu0 0
  %709 = vmatpush1.bf16.msra.mxu0 0
  %710 = vmatprep.mubr.bf16.mxu0 0
  %711 = vmatmul.mubr.bf16.gmra.mrb[0].mxu0 %v676
  %v712 = vpop.f32.mrb[0].mxu0
  %v713 = vadd.f32 0.0, %v712
  %v714 = vpop.f32.mrb[0].mxu0
  %v715 = vpop.f32.mrb[0].mxu0
  %v716 = vpop.f32.mrb[0].mxu0
  %717 = vdwg.mxu0
  %v718 = vadd.f32 %v165, %v713
  %v719 = vxor.u32 %v718, 2147483648
  %v720 = vmul.f32 %v719, 1.442695
  %v721 = vpow.pop %v720
  %v722 = vadd.f32 %v721, 1.0
  %v723 = vrcp.pop %v722
  %v724 = vmul.f32 1.0, %v723
  %v725 = vadd.f32 %v713, %v248
  %727 = vrot.lane.b32.xlu0 %v725, 64
  %v728 = vpop.permute.xlu0 %727
  %v730 = vmul.f32 %v724, %v728
  %732 = vrot.lane.b32.xlu0 %v730, 64
  %v733 = vpop.permute.xlu0 %732
  %v735 = vadd.f32 %v165, %v733
  %v736 = vtanh.pop %v735
  %v737 = vsub.f32 1.0, %v724
  %739 = vrot.lane.b32.xlu0 %v736, 96
  %v740 = vpop.permute.xlu0 %739
  %v742 = vmul.f32 %v737, %v740
  %v743 = vmul.f32 %v724, %v596
  %v744 = vadd.f32 %v742, %v743
  %746 = vrot.lane.b32.xlu0 %v744, 96
  %v747 = vpop.permute.xlu0 %746
  %v749 = vsel %vm196, %v747, %v670
  %v750 = vpack.c.bf16 %v749, %v749
  %v752 = vsel %vm306, %v750, 0
  %754 = vmatprep.subr.bf16.mxu0 0
  %755 = vmatpush1.bf16.msra.mxu0 %v298
  %756 = vmatprep.subr.bf16.mxu0 0
  %757 = vmatpush1.bf16.msra.mxu0 %v299
  %758 = vmatprep.subr.bf16.mxu0 0
  %759 = vmatpush1.bf16.msra.mxu0 %v300
  %760 = vmatprep.subr.bf16.mxu0 0
  %761 = vmatpush1.bf16.msra.mxu0 %v301
  %762 = vmatprep.subr.bf16.mxu0 0
  %763 = vmatpush1.bf16.msra.mxu0 0
  %764 = vmatprep.subr.bf16.mxu0 0
  %765 = vmatpush1.bf16.msra.mxu0 0
  %766 = vmatprep.subr.bf16.mxu0 0
  %767 = vmatpush1.bf16.msra.mxu0 0
  %768 = vmatprep.subr.bf16.mxu0 0
  %769 = vmatpush1.bf16.msra.mxu0 0
  %770 = vmatprep.subr.bf16.mxu0 0
  %771 = vmatpush1.bf16.msra.mxu0 0
  %772 = vmatprep.subr.bf16.mxu0 0
  %773 = vmatpush1.bf16.msra.mxu0 0
  %774 = vmatprep.subr.bf16.mxu0 0
  %775 = vmatpush1.bf16.msra.mxu0 0
  %776 = vmatprep.subr.bf16.mxu0 0
  %777 = vmatpush1.bf16.msra.mxu0 0
  %778 = vmatprep.subr.bf16.mxu0 0
  %779 = vmatpush1.bf16.msra.mxu0 0
  %780 = vmatprep.subr.bf16.mxu0 0
  %781 = vmatpush1.bf16.msra.mxu0 0
  %782 = vmatprep.subr.bf16.mxu0 0
  %783 = vmatpush1.bf16.msra.mxu0 0
  %784 = vmatprep.subr.bf16.mxu0 0
  %785 = vmatpush1.bf16.msra.mxu0 0
  %786 = vmatprep.mubr.bf16.mxu0 0
  %787 = vmatmul.mubr.bf16.gmra.mrb[0].mxu0 %v752
  %v788 = vpop.f32.mrb[0].mxu0
  %v789 = vadd.f32 %v280, %v788
  %v790 = vpop.f32.mrb[0].mxu0
  %v791 = vpop.f32.mrb[0].mxu0
  %v792 = vpop.f32.mrb[0].mxu0
  %793 = vdwg.mxu0
  %v794 = vxor.u32 %v789, 2147483648
  %v795 = vmul.f32 %v794, 1.442695
  %v796 = vpow.pop %v795
  %v797 = vadd.f32 %v796, 1.0
  %v798 = vrcp.pop %v797
  %v799 = vmul.f32 1.0, %v798
  %801 = vrot.lane.b32.xlu0 %v789, 32
  %v802 = vpop.permute.xlu0 %801
  %v804 = vmul.f32 %v799, %v802
  %806 = vrot.lane.b32.xlu0 %v804, 64
  %v807 = vpop.permute.xlu0 %806
  %v809 = vadd.f32 %v789, %v807
  %v810 = vtanh.pop %v809
  %v811 = vsub.f32 1.0, %v799
  %813 = vrot.lane.b32.xlu0 %v810, 96
  %v814 = vpop.permute.xlu0 %813
  %v816 = vmul.f32 %v811, %v814
  %v817 = vmul.f32 %v799, %v670
  %v818 = vadd.f32 %v816, %v817
  %v819 = vpack.c.bf16 %v744, %v744
  %821 = vrot.lane.b32.xlu0 %v819, 96
  %v822 = vpop.permute.xlu0 %821
  %v824 = vsel %vm196, %v822, 0
  %826 = vmatprep.subr.bf16.mxu0 0
  %827 = vmatpush1.bf16.msra.mxu0 %v192
  %828 = vmatprep.subr.bf16.mxu0 0
  %829 = vmatpush1.bf16.msra.mxu0 %v193
  %830 = vmatprep.subr.bf16.mxu0 0
  %831 = vmatpush1.bf16.msra.mxu0 0
  %832 = vmatprep.subr.bf16.mxu0 0
  %833 = vmatpush1.bf16.msra.mxu0 0
  %834 = vmatprep.subr.bf16.mxu0 0
  %835 = vmatpush1.bf16.msra.mxu0 0
  %836 = vmatprep.subr.bf16.mxu0 0
  %837 = vmatpush1.bf16.msra.mxu0 0
  %838 = vmatprep.subr.bf16.mxu0 0
  %839 = vmatpush1.bf16.msra.mxu0 0
  %840 = vmatprep.subr.bf16.mxu0 0
  %841 = vmatpush1.bf16.msra.mxu0 0
  %842 = vmatprep.subr.bf16.mxu0 0
  %843 = vmatpush1.bf16.msra.mxu0 0
  %844 = vmatprep.subr.bf16.mxu0 0
  %845 = vmatpush1.bf16.msra.mxu0 0
  %846 = vmatprep.subr.bf16.mxu0 0
  %847 = vmatpush1.bf16.msra.mxu0 0
  %848 = vmatprep.subr.bf16.mxu0 0
  %849 = vmatpush1.bf16.msra.mxu0 0
  %850 = vmatprep.subr.bf16.mxu0 0
  %851 = vmatpush1.bf16.msra.mxu0 0
  %852 = vmatprep.subr.bf16.mxu0 0
  %853 = vmatpush1.bf16.msra.mxu0 0
  %854 = vmatprep.subr.bf16.mxu0 0
  %855 = vmatpush1.bf16.msra.mxu0 0
  %856 = vmatprep.subr.bf16.mxu0 0
  %857 = vmatpush1.bf16.msra.mxu0 0
  %858 = vmatprep.mubr.bf16.mxu0 0
  %859 = vmatmul.mubr.bf16.gmra.mrb[0].mxu0 %v824
  %v860 = vpop.f32.mrb[0].mxu0
  %v861 = vadd.f32 0.0, %v860
  %v862 = vpop.f32.mrb[0].mxu0
  %v863 = vpop.f32.mrb[0].mxu0
  %v864 = vpop.f32.mrb[0].mxu0
  %865 = vdwg.mxu0
  %v866 = vadd.f32 %v170, %v861
  %v867 = vxor.u32 %v866, 2147483648
  %v868 = vmul.f32 %v867, 1.442695
  %v869 = vpow.pop %v868
  %v870 = vadd.f32 %v869, 1.0
  %v871 = vrcp.pop %v870
  %v872 = vmul.f32 1.0, %v871
  %v873 = vadd.f32 %v861, %v248
  %875 = vrot.lane.b32.xlu0 %v873, 64
  %v876 = vpop.permute.xlu0 %875
  %v878 = vmul.f32 %v872, %v876
  %880 = vrot.lane.b32.xlu0 %v878, 64
  %v881 = vpop.permute.xlu0 %880
  %v883 = vadd.f32 %v170, %v881
  %v884 = vtanh.pop %v883
  %v885 = vsub.f32 1.0, %v872
  %887 = vrot.lane.b32.xlu0 %v884, 96
  %v888 = vpop.permute.xlu0 %887
  %v890 = vmul.f32 %v885, %v888
  %v891 = vmul.f32 %v872, %v744
  %v892 = vadd.f32 %v890, %v891
  %894 = vrot.lane.b32.xlu0 %v892, 96
  %v895 = vpop.permute.xlu0 %894
  %v897 = vsel %vm196, %v895, %v818
  %v898 = vpack.c.bf16 %v897, %v897
  %v900 = vsel %vm306, %v898, 0
  %902 = vmatprep.subr.bf16.mxu0 0
  %903 = vmatpush1.bf16.msra.mxu0 %v298
  %904 = vmatprep.subr.bf16.mxu0 0
  %905 = vmatpush1.bf16.msra.mxu0 %v299
  %906 = vmatprep.subr.bf16.mxu0 0
  %907 = vmatpush1.bf16.msra.mxu0 %v300
  %908 = vmatprep.subr.bf16.mxu0 0
  %909 = vmatpush1.bf16.msra.mxu0 %v301
  %910 = vmatprep.subr.bf16.mxu0 0
  %911 = vmatpush1.bf16.msra.mxu0 0
  %912 = vmatprep.subr.bf16.mxu0 0
  %913 = vmatpush1.bf16.msra.mxu0 0
  %914 = vmatprep.subr.bf16.mxu0 0
  %915 = vmatpush1.bf16.msra.mxu0 0
  %916 = vmatprep.subr.bf16.mxu0 0
  %917 = vmatpush1.bf16.msra.mxu0 0
  %918 = vmatprep.subr.bf16.mxu0 0
  %919 = vmatpush1.bf16.msra.mxu0 0
  %920 = vmatprep.subr.bf16.mxu0 0
  %921 = vmatpush1.bf16.msra.mxu0 0
  %922 = vmatprep.subr.bf16.mxu0 0
  %923 = vmatpush1.bf16.msra.mxu0 0
  %924 = vmatprep.subr.bf16.mxu0 0
  %925 = vmatpush1.bf16.msra.mxu0 0
  %926 = vmatprep.subr.bf16.mxu0 0
  %927 = vmatpush1.bf16.msra.mxu0 0
  %928 = vmatprep.subr.bf16.mxu0 0
  %929 = vmatpush1.bf16.msra.mxu0 0
  %930 = vmatprep.subr.bf16.mxu0 0
  %931 = vmatpush1.bf16.msra.mxu0 0
  %932 = vmatprep.subr.bf16.mxu0 0
  %933 = vmatpush1.bf16.msra.mxu0 0
  %934 = vmatprep.mubr.bf16.mxu0 0
  %935 = vmatmul.mubr.bf16.gmra.mrb[0].mxu0 %v900
  %v936 = vpop.f32.mrb[0].mxu0
  %v937 = vadd.f32 %v280, %v936
  %v938 = vpop.f32.mrb[0].mxu0
  %v939 = vpop.f32.mrb[0].mxu0
  %v940 = vpop.f32.mrb[0].mxu0
  %941 = vdwg.mxu0
  %v942 = vxor.u32 %v937, 2147483648
  %v943 = vmul.f32 %v942, 1.442695
  %v944 = vpow.pop %v943
  %v945 = vadd.f32 %v944, 1.0
  %v946 = vrcp.pop %v945
  %v947 = vmul.f32 1.0, %v946
  %949 = vrot.lane.b32.xlu0 %v937, 32
  %v950 = vpop.permute.xlu0 %949
  %v952 = vmul.f32 %v947, %v950
  %954 = vrot.lane.b32.xlu0 %v952, 64
  %v955 = vpop.permute.xlu0 %954
  %v957 = vadd.f32 %v937, %v955
  %v958 = vtanh.pop %v957
  %v959 = vsub.f32 1.0, %v947
  %961 = vrot.lane.b32.xlu0 %v958, 96
  %v962 = vpop.permute.xlu0 %961
  %v964 = vmul.f32 %v959, %v962
  %v965 = vmul.f32 %v947, %v818
  %v966 = vadd.f32 %v964, %v965
  %v967 = vpack.c.bf16 %v892, %v892
  %969 = vrot.lane.b32.xlu0 %v967, 96
  %v970 = vpop.permute.xlu0 %969
  %v972 = vsel %vm196, %v970, 0
  %974 = vmatprep.subr.bf16.mxu0 0
  %975 = vmatpush1.bf16.msra.mxu0 %v192
  %976 = vmatprep.subr.bf16.mxu0 0
  %977 = vmatpush1.bf16.msra.mxu0 %v193
  %978 = vmatprep.subr.bf16.mxu0 0
  %979 = vmatpush1.bf16.msra.mxu0 0
  %980 = vmatprep.subr.bf16.mxu0 0
  %981 = vmatpush1.bf16.msra.mxu0 0
  %982 = vmatprep.subr.bf16.mxu0 0
  %983 = vmatpush1.bf16.msra.mxu0 0
  %984 = vmatprep.subr.bf16.mxu0 0
  %985 = vmatpush1.bf16.msra.mxu0 0
  %986 = vmatprep.subr.bf16.mxu0 0
  %987 = vmatpush1.bf16.msra.mxu0 0
  %988 = vmatprep.subr.bf16.mxu0 0
  %989 = vmatpush1.bf16.msra.mxu0 0
  %990 = vmatprep.subr.bf16.mxu0 0
  %991 = vmatpush1.bf16.msra.mxu0 0
  %992 = vmatprep.subr.bf16.mxu0 0
  %993 = vmatpush1.bf16.msra.mxu0 0
  %994 = vmatprep.subr.bf16.mxu0 0
  %995 = vmatpush1.bf16.msra.mxu0 0
  %996 = vmatprep.subr.bf16.mxu0 0
  %997 = vmatpush1.bf16.msra.mxu0 0
  %998 = vmatprep.subr.bf16.mxu0 0
  %999 = vmatpush1.bf16.msra.mxu0 0
  %1000 = vmatprep.subr.bf16.mxu0 0
  %1001 = vmatpush1.bf16.msra.mxu0 0
  %1002 = vmatprep.subr.bf16.mxu0 0
  %1003 = vmatpush1.bf16.msra.mxu0 0
  %1004 = vmatprep.subr.bf16.mxu0 0
  %1005 = vmatpush1.bf16.msra.mxu0 0
  %1006 = vmatprep.mubr.bf16.mxu0 0
  %1007 = vmatmul.mubr.bf16.gmra.mrb[0].mxu0 %v972
  %v1008 = vpop.f32.mrb[0].mxu0
  %v1009 = vadd.f32 0.0, %v1008
  %v1010 = vpop.f32.mrb[0].mxu0
  %v1011 = vpop.f32.mrb[0].mxu0
  %v1012 = vpop.f32.mrb[0].mxu0
  %1013 = vdwg.mxu0
  %v1014 = vadd.f32 %v173, %v1009
  %v1015 = vxor.u32 %v1014, 2147483648
  %v1016 = vmul.f32 %v1015, 1.442695
  %v1017 = vpow.pop %v1016
  %v1018 = vadd.f32 %v1017, 1.0
  %v1019 = vrcp.pop %v1018
  %v1020 = vmul.f32 1.0, %v1019
  %v1021 = vadd.f32 %v1009, %v248
  %1023 = vrot.lane.b32.xlu0 %v1021, 64
  %v1024 = vpop.permute.xlu0 %1023
  %v1026 = vmul.f32 %v1020, %v1024
  %1028 = vrot.lane.b32.xlu0 %v1026, 64
  %v1029 = vpop.permute.xlu0 %1028
  %v1031 = vadd.f32 %v173, %v1029
  %v1032 = vtanh.pop %v1031
  %v1033 = vsub.f32 1.0, %v1020
  %1035 = vrot.lane.b32.xlu0 %v1032, 96
  %v1036 = vpop.permute.xlu0 %1035
  %v1038 = vmul.f32 %v1033, %v1036
  %v1039 = vmul.f32 %v1020, %v892
  %v1040 = vadd.f32 %v1038, %v1039
  %1042 = vrot.lane.b32.xlu0 %v1040, 96
  %v1043 = vpop.permute.xlu0 %1042
  %v1045 = vsel %vm196, %v1043, %v966
  %v1046 = vpack.c.bf16 %v1045, %v1045
  %v1048 = vsel %vm306, %v1046, 0
  %1050 = vmatprep.subr.bf16.mxu0 0
  %1051 = vmatpush1.bf16.msra.mxu0 %v298
  %1052 = vmatprep.subr.bf16.mxu0 0
  %1053 = vmatpush1.bf16.msra.mxu0 %v299
  %1054 = vmatprep.subr.bf16.mxu0 0
  %1055 = vmatpush1.bf16.msra.mxu0 %v300
  %1056 = vmatprep.subr.bf16.mxu0 0
  %1057 = vmatpush1.bf16.msra.mxu0 %v301
  %1058 = vmatprep.subr.bf16.mxu0 0
  %1059 = vmatpush1.bf16.msra.mxu0 0
  %1060 = vmatprep.subr.bf16.mxu0 0
  %1061 = vmatpush1.bf16.msra.mxu0 0
  %1062 = vmatprep.subr.bf16.mxu0 0
  %1063 = vmatpush1.bf16.msra.mxu0 0
  %1064 = vmatprep.subr.bf16.mxu0 0
  %1065 = vmatpush1.bf16.msra.mxu0 0
  %1066 = vmatprep.subr.bf16.mxu0 0
  %1067 = vmatpush1.bf16.msra.mxu0 0
  %1068 = vmatprep.subr.bf16.mxu0 0
  %1069 = vmatpush1.bf16.msra.mxu0 0
  %1070 = vmatprep.subr.bf16.mxu0 0
  %1071 = vmatpush1.bf16.msra.mxu0 0
  %1072 = vmatprep.subr.bf16.mxu0 0
  %1073 = vmatpush1.bf16.msra.mxu0 0
  %1074 = vmatprep.subr.bf16.mxu0 0
  %1075 = vmatpush1.bf16.msra.mxu0 0
  %1076 = vmatprep.subr.bf16.mxu0 0
  %1077 = vmatpush1.bf16.msra.mxu0 0
  %1078 = vmatprep.subr.bf16.mxu0 0
  %1079 = vmatpush1.bf16.msra.mxu0 0
  %1080 = vmatprep.subr.bf16.mxu0 0
  %1081 = vmatpush1.bf16.msra.mxu0 0
  %1082 = vmatprep.mubr.bf16.mxu0 0
  %1083 = vmatmul.mubr.bf16.gmra.mrb[0].mxu0 %v1048
  %v1084 = vpop.f32.mrb[0].mxu0
  %v1085 = vadd.f32 %v280, %v1084
  %v1086 = vpop.f32.mrb[0].mxu0
  %v1087 = vpop.f32.mrb[0].mxu0
  %v1088 = vpop.f32.mrb[0].mxu0
  %1089 = vdwg.mxu0
  %v1090 = vxor.u32 %v1085, 2147483648
  %v1091 = vmul.f32 %v1090, 1.442695
  %v1092 = vpow.pop %v1091
  %v1093 = vadd.f32 %v1092, 1.0
  %v1094 = vrcp.pop %v1093
  %v1095 = vmul.f32 1.0, %v1094
  %1097 = vrot.lane.b32.xlu0 %v1085, 32
  %v1098 = vpop.permute.xlu0 %1097
  %v1100 = vmul.f32 %v1095, %v1098
  %1102 = vrot.lane.b32.xlu0 %v1100, 64
  %v1103 = vpop.permute.xlu0 %1102
  %v1105 = vadd.f32 %v1085, %v1103
  %v1106 = vtanh.pop %v1105
  %v1107 = vsub.f32 1.0, %v1095
  %1109 = vrot.lane.b32.xlu0 %v1106, 96
  %v1110 = vpop.permute.xlu0 %1109
  %v1112 = vmul.f32 %v1107, %v1110
  %v1113 = vmul.f32 %v1095, %v966
  %v1114 = vadd.f32 %v1112, %v1113
  %v1115 = vpack.c.bf16 %v1040, %v1040
  %1117 = vrot.lane.b32.xlu0 %v1115, 96
  %v1118 = vpop.permute.xlu0 %1117
  %v1120 = vsel %vm196, %v1118, 0
  %1122 = vmatprep.subr.bf16.mxu0 0
  %1123 = vmatpush1.bf16.msra.mxu0 %v192
  %1124 = vmatprep.subr.bf16.mxu0 0
  %1125 = vmatpush1.bf16.msra.mxu0 %v193
  %1126 = vmatprep.subr.bf16.mxu0 0
  %1127 = vmatpush1.bf16.msra.mxu0 0
  %1128 = vmatprep.subr.bf16.mxu0 0
  %1129 = vmatpush1.bf16.msra.mxu0 0
  %1130 = vmatprep.subr.bf16.mxu0 0
  %1131 = vmatpush1.bf16.msra.mxu0 0
  %1132 = vmatprep.subr.bf16.mxu0 0
  %1133 = vmatpush1.bf16.msra.mxu0 0
  %1134 = vmatprep.subr.bf16.mxu0 0
  %1135 = vmatpush1.bf16.msra.mxu0 0
  %1136 = vmatprep.subr.bf16.mxu0 0
  %1137 = vmatpush1.bf16.msra.mxu0 0
  %1138 = vmatprep.subr.bf16.mxu0 0
  %1139 = vmatpush1.bf16.msra.mxu0 0
  %1140 = vmatprep.subr.bf16.mxu0 0
  %1141 = vmatpush1.bf16.msra.mxu0 0
  %1142 = vmatprep.subr.bf16.mxu0 0
  %1143 = vmatpush1.bf16.msra.mxu0 0
  %1144 = vmatprep.subr.bf16.mxu0 0
  %1145 = vmatpush1.bf16.msra.mxu0 0
  %1146 = vmatprep.subr.bf16.mxu0 0
  %1147 = vmatpush1.bf16.msra.mxu0 0
  %1148 = vmatprep.subr.bf16.mxu0 0
  %1149 = vmatpush1.bf16.msra.mxu0 0
  %1150 = vmatprep.subr.bf16.mxu0 0
  %1151 = vmatpush1.bf16.msra.mxu0 0
  %1152 = vmatprep.subr.bf16.mxu0 0
  %1153 = vmatpush1.bf16.msra.mxu0 0
  %1154 = vmatprep.mubr.bf16.mxu0 0
  %1155 = vmatmul.mubr.bf16.gmra.mrb[0].mxu0 %v1120
  %v1156 = vpop.f32.mrb[0].mxu0
  %v1157 = vadd.f32 0.0, %v1156
  %v1158 = vpop.f32.mrb[0].mxu0
  %v1159 = vpop.f32.mrb[0].mxu0
  %v1160 = vpop.f32.mrb[0].mxu0
  %1161 = vdwg.mxu0
  %v1162 = vadd.f32 %v178, %v1157
  %v1163 = vxor.u32 %v1162, 2147483648
  %v1164 = vmul.f32 %v1163, 1.442695
  %v1165 = vpow.pop %v1164
  %v1166 = vadd.f32 %v1165, 1.0
  %v1167 = vrcp.pop %v1166
  %v1168 = vmul.f32 1.0, %v1167
  %v1169 = vadd.f32 %v1157, %v248
  %1171 = vrot.lane.b32.xlu0 %v1169, 64
  %v1172 = vpop.permute.xlu0 %1171
  %v1174 = vmul.f32 %v1168, %v1172
  %1176 = vrot.lane.b32.xlu0 %v1174, 64
  %v1177 = vpop.permute.xlu0 %1176
  %v1179 = vadd.f32 %v178, %v1177
  %v1180 = vtanh.pop %v1179
  %v1181 = vsub.f32 1.0, %v1168
  %1183 = vrot.lane.b32.xlu0 %v1180, 96
  %v1184 = vpop.permute.xlu0 %1183
  %v1186 = vmul.f32 %v1181, %v1184
  %v1187 = vmul.f32 %v1168, %v1040
  %v1188 = vadd.f32 %v1186, %v1187
  %1190 = vrot.lane.b32.xlu0 %v1188, 96
  %v1191 = vpop.permute.xlu0 %1190
  %v1193 = vsel %vm196, %v1191, %v1114
  %v1194 = vpack.c.bf16 %v1193, %v1193
  %v1196 = vsel %vm306, %v1194, 0
  %1198 = vmatprep.subr.bf16.mxu0 0
  %1199 = vmatpush1.bf16.msra.mxu0 %v298
  %1200 = vmatprep.subr.bf16.mxu0 0
  %1201 = vmatpush1.bf16.msra.mxu0 %v299
  %1202 = vmatprep.subr.bf16.mxu0 0
  %1203 = vmatpush1.bf16.msra.mxu0 %v300
  %1204 = vmatprep.subr.bf16.mxu0 0
  %1205 = vmatpush1.bf16.msra.mxu0 %v301
  %1206 = vmatprep.subr.bf16.mxu0 0
  %1207 = vmatpush1.bf16.msra.mxu0 0
  %1208 = vmatprep.subr.bf16.mxu0 0
  %1209 = vmatpush1.bf16.msra.mxu0 0
  %1210 = vmatprep.subr.bf16.mxu0 0
  %1211 = vmatpush1.bf16.msra.mxu0 0
  %1212 = vmatprep.subr.bf16.mxu0 0
  %1213 = vmatpush1.bf16.msra.mxu0 0
  %1214 = vmatprep.subr.bf16.mxu0 0
  %1215 = vmatpush1.bf16.msra.mxu0 0
  %1216 = vmatprep.subr.bf16.mxu0 0
  %1217 = vmatpush1.bf16.msra.mxu0 0
  %1218 = vmatprep.subr.bf16.mxu0 0
  %1219 = vmatpush1.bf16.msra.mxu0 0
  %1220 = vmatprep.subr.bf16.mxu0 0
  %1221 = vmatpush1.bf16.msra.mxu0 0
  %1222 = vmatprep.subr.bf16.mxu0 0
  %1223 = vmatpush1.bf16.msra.mxu0 0
  %1224 = vmatprep.subr.bf16.mxu0 0
  %1225 = vmatpush1.bf16.msra.mxu0 0
  %1226 = vmatprep.subr.bf16.mxu0 0
  %1227 = vmatpush1.bf16.msra.mxu0 0
  %1228 = vmatprep.subr.bf16.mxu0 0
  %1229 = vmatpush1.bf16.msra.mxu0 0
  %1230 = vmatprep.mubr.bf16.mxu0 0
  %1231 = vmatmul.mubr.bf16.gmra.mrb[0].mxu0 %v1196
  %v1232 = vpop.f32.mrb[0].mxu0
  %v1233 = vadd.f32 %v280, %v1232
  %v1234 = vpop.f32.mrb[0].mxu0
  %v1235 = vpop.f32.mrb[0].mxu0
  %v1236 = vpop.f32.mrb[0].mxu0
  %1237 = vdwg.mxu0
  %v1238 = vxor.u32 %v1233, 2147483648
  %v1239 = vmul.f32 %v1238, 1.442695
  %v1240 = vpow.pop %v1239
  %v1241 = vadd.f32 %v1240, 1.0
  %v1242 = vrcp.pop %v1241
  %v1243 = vmul.f32 1.0, %v1242
  %1245 = vrot.lane.b32.xlu0 %v1233, 32
  %v1246 = vpop.permute.xlu0 %1245
  %v1248 = vmul.f32 %v1243, %v1246
  %1250 = vrot.lane.b32.xlu0 %v1248, 64
  %v1251 = vpop.permute.xlu0 %1250
  %v1253 = vadd.f32 %v1233, %v1251
  %v1254 = vtanh.pop %v1253
  %v1255 = vsub.f32 1.0, %v1243
  %1257 = vrot.lane.b32.xlu0 %v1254, 96
  %v1258 = vpop.permute.xlu0 %1257
  %v1260 = vmul.f32 %v1255, %v1258
  %v1261 = vmul.f32 %v1243, %v1114
  %v1262 = vadd.f32 %v1260, %v1261
  %v1263 = vpack.c.bf16 %v1188, %v1188
  %1265 = vrot.lane.b32.xlu0 %v1263, 96
  %v1266 = vpop.permute.xlu0 %1265
  %v1268 = vsel %vm196, %v1266, 0
  %1270 = vmatprep.subr.bf16.mxu0 0
  %1271 = vmatpush1.bf16.msra.mxu0 %v192
  %1272 = vmatprep.subr.bf16.mxu0 0
  %1273 = vmatpush1.bf16.msra.mxu0 %v193
  %1274 = vmatprep.subr.bf16.mxu0 0
  %1275 = vmatpush1.bf16.msra.mxu0 0
  %1276 = vmatprep.subr.bf16.mxu0 0
  %1277 = vmatpush1.bf16.msra.mxu0 0
  %1278 = vmatprep.subr.bf16.mxu0 0
  %1279 = vmatpush1.bf16.msra.mxu0 0
  %1280 = vmatprep.subr.bf16.mxu0 0
  %1281 = vmatpush1.bf16.msra.mxu0 0
  %1282 = vmatprep.subr.bf16.mxu0 0
  %1283 = vmatpush1.bf16.msra.mxu0 0
  %1284 = vmatprep.subr.bf16.mxu0 0
  %1285 = vmatpush1.bf16.msra.mxu0 0
  %1286 = vmatprep.subr.bf16.mxu0 0
  %1287 = vmatpush1.bf16.msra.mxu0 0
  %1288 = vmatprep.subr.bf16.mxu0 0
  %1289 = vmatpush1.bf16.msra.mxu0 0
  %1290 = vmatprep.subr.bf16.mxu0 0
  %1291 = vmatpush1.bf16.msra.mxu0 0
  %1292 = vmatprep.subr.bf16.mxu0 0
  %1293 = vmatpush1.bf16.msra.mxu0 0
  %1294 = vmatprep.subr.bf16.mxu0 0
  %1295 = vmatpush1.bf16.msra.mxu0 0
  %1296 = vmatprep.subr.bf16.mxu0 0
  %1297 = vmatpush1.bf16.msra.mxu0 0
  %1298 = vmatprep.subr.bf16.mxu0 0
  %1299 = vmatpush1.bf16.msra.mxu0 0
  %1300 = vmatprep.subr.bf16.mxu0 0
  %1301 = vmatpush1.bf16.msra.mxu0 0
  %1302 = vmatprep.mubr.bf16.mxu0 0
  %1303 = vmatmul.mubr.bf16.gmra.mrb[0].mxu0 %v1268
  %v1304 = vpop.f32.mrb[0].mxu0
  %v1305 = vadd.f32 0.0, %v1304
  %v1306 = vpop.f32.mrb[0].mxu0
  %v1307 = vpop.f32.mrb[0].mxu0
  %v1308 = vpop.f32.mrb[0].mxu0
  %1309 = vdwg.mxu0
  %v1310 = vadd.f32 %v181, %v1305
  %v1311 = vxor.u32 %v1310, 2147483648
  %v1312 = vmul.f32 %v1311, 1.442695
  %v1313 = vpow.pop %v1312
  %v1314 = vadd.f32 %v1313, 1.0
  %v1315 = vrcp.pop %v1314
  %v1316 = vmul.f32 1.0, %v1315
  %v1317 = vadd.f32 %v1305, %v248
  %1319 = vrot.lane.b32.xlu0 %v1317, 64
  %v1320 = vpop.permute.xlu0 %1319
  %v1322 = vmul.f32 %v1316, %v1320
  %1324 = vrot.lane.b32.xlu0 %v1322, 64
  %v1325 = vpop.permute.xlu0 %1324
  %v1327 = vadd.f32 %v181, %v1325
  %v1328 = vtanh.pop %v1327
  %v1329 = vsub.f32 1.0, %v1316
  %1331 = vrot.lane.b32.xlu0 %v1328, 96
  %v1332 = vpop.permute.xlu0 %1331
  %v1334 = vmul.f32 %v1329, %v1332
  %v1335 = vmul.f32 %v1316, %v1188
  %v1336 = vadd.f32 %v1334, %v1335
  %1338 = vrot.lane.b32.xlu0 %v1336, 96
  %v1339 = vpop.permute.xlu0 %1338
  %v1341 = vsel %vm196, %v1339, %v1262
  %v1342 = vpack.c.bf16 %v1341, %v1341
  %v1344 = vsel %vm306, %v1342, 0
  %1346 = vmatprep.subr.bf16.mxu0 0
  %1347 = vmatpush1.bf16.msra.mxu0 %v298
  %1348 = vmatprep.subr.bf16.mxu0 0
  %1349 = vmatpush1.bf16.msra.mxu0 %v299
  %1350 = vmatprep.subr.bf16.mxu0 0
  %1351 = vmatpush1.bf16.msra.mxu0 %v300
  %1352 = vmatprep.subr.bf16.mxu0 0
  %1353 = vmatpush1.bf16.msra.mxu0 %v301
  %1354 = vmatprep.subr.bf16.mxu0 0
  %1355 = vmatpush1.bf16.msra.mxu0 0
  %1356 = vmatprep.subr.bf16.mxu0 0
  %1357 = vmatpush1.bf16.msra.mxu0 0
  %1358 = vmatprep.subr.bf16.mxu0 0
  %1359 = vmatpush1.bf16.msra.mxu0 0
  %1360 = vmatprep.subr.bf16.mxu0 0
  %1361 = vmatpush1.bf16.msra.mxu0 0
  %1362 = vmatprep.subr.bf16.mxu0 0
  %1363 = vmatpush1.bf16.msra.mxu0 0
  %1364 = vmatprep.subr.bf16.mxu0 0
  %1365 = vmatpush1.bf16.msra.mxu0 0
  %1366 = vmatprep.subr.bf16.mxu0 0
  %1367 = vmatpush1.bf16.msra.mxu0 0
  %1368 = vmatprep.subr.bf16.mxu0 0
  %1369 = vmatpush1.bf16.msra.mxu0 0
  %1370 = vmatprep.subr.bf16.mxu0 0
  %1371 = vmatpush1.bf16.msra.mxu0 0
  %1372 = vmatprep.subr.bf16.mxu0 0
  %1373 = vmatpush1.bf16.msra.mxu0 0
  %1374 = vmatprep.subr.bf16.mxu0 0
  %1375 = vmatpush1.bf16.msra.mxu0 0
  %1376 = vmatprep.subr.bf16.mxu0 0
  %1377 = vmatpush1.bf16.msra.mxu0 0
  %1378 = vmatprep.mubr.bf16.mxu0 0
  %1379 = vmatmul.mubr.bf16.gmra.mrb[0].mxu0 %v1344
  %v1380 = vpop.f32.mrb[0].mxu0
  %v1381 = vadd.f32 %v280, %v1380
  %v1382 = vpop.f32.mrb[0].mxu0
  %v1383 = vpop.f32.mrb[0].mxu0
  %v1384 = vpop.f32.mrb[0].mxu0
  %1385 = vdwg.mxu0
  %v1386 = vxor.u32 %v1381, 2147483648
  %v1387 = vmul.f32 %v1386, 1.442695
  %v1388 = vpow.pop %v1387
  %v1389 = vadd.f32 %v1388, 1.0
  %v1390 = vrcp.pop %v1389
  %v1391 = vmul.f32 1.0, %v1390
  %1393 = vrot.lane.b32.xlu0 %v1381, 32
  %v1394 = vpop.permute.xlu0 %1393
  %v1396 = vmul.f32 %v1391, %v1394
  %1398 = vrot.lane.b32.xlu0 %v1396, 64
  %v1399 = vpop.permute.xlu0 %1398
  %v1401 = vadd.f32 %v1381, %v1399
  %v1402 = vtanh.pop %v1401
  %v1403 = vsub.f32 1.0, %v1391
  %1405 = vrot.lane.b32.xlu0 %v1402, 96
  %v1406 = vpop.permute.xlu0 %1405
  %v1408 = vmul.f32 %v1403, %v1406
  %v1409 = vmul.f32 %v1391, %v1262
  %v1410 = vadd.f32 %v1408, %v1409
  %1412 = vrot.lane.b32.xlu0 %v1410, 96
  %v1413 = vpop.permute.xlu0 %1412
  %v1415 = vsel %vm196, %v1413, 0.0
  %1416 = vadd.xlane.f32.xlu0 %v1415
  %v1417 = vpop.xlane.xlu0 %1416
  %v1418 = vrcp.pop 32.0
  %v1419 = vmul.f32 %v1417, %v1418
  %v1420 = vsub.f32 %v1410, %v1419
  %v1421 = vmul.f32 %v1420, %v1420
  %1423 = vrot.lane.b32.xlu0 %v1421, 96
  %v1424 = vpop.permute.xlu0 %1423
  %v1426 = vsel %vm196, %v1424, 0.0
  %1427 = vadd.xlane.f32.xlu0 %v1426
  %v1428 = vpop.xlane.xlu0 %1427
  %v1429 = vmul.f32 %v1428, %v1418
  %v1430 = vadd.f32 %v1429, 1e-05
  %v1431 = vrsqrt.pop %v1430
  %v1432 = vmul.f32 %v1420, %v1431
  %v1433 = vld [vmem:[%s7] sm:$0x1]
  %v1435 = vlaneseq
  %v1436 = vshrl.u32 %v1435, 7
  %v1437 = vsub.s32 0, %v1436
  %v1438 = vrot.slane %v1433, %v1437
  %1439 = vrot.lane.b32.xlu0 %v1438, 32
  %v1440 = vpop.permute.xlu0 %1439
  %v1442 = vmul.f32 %v1432, %v1440
  %v1443 = vld [vmem:[%s8] sm:$0x1]
  %v1445 = vlaneseq
  %v1446 = vshrl.u32 %v1445, 7
  %v1447 = vsub.s32 0, %v1446
  %v1448 = vrot.slane %v1443, %v1447
  %1449 = vrot.lane.b32.xlu0 %v1448, 32
  %v1450 = vpop.permute.xlu0 %1449
  %v1452 = vadd.f32 %v1442, %v1450
  %v1453 = vld [vmem:[%s9] sm:$0xff]
  %v1454 = vld [vmem:[%s9 + $0x8] sm:$0xff]
  %v1455 = vld [vmem:[%s9 + $0x10] sm:$0xff]
  %v1456 = vld [vmem:[%s9 + $0x18] sm:$0xff]
  %v1457 = vld [vmem:[%s10] sm:$0x1]
  %v1459 = vlaneseq
  %v1460 = vshrl.u32 %v1459, 7
  %v1461 = vsub.s32 0, %v1460
  %v1462 = vrot.slane %v1457, %v1461
  %1465 = vrot.lane.b32.xlu0 %v1452, 96
  %v1466 = vpop.permute.xlu0 %1465
  %v1467 = vsel %vm196, %v1466, 0
  %1469 = vmatprep.subr.mxu0 0.0
  %1470 = vmatpush1.msra.mxu0 %v1453
  %1471 = vmatprep.subr.mxu0 0.0
  %1472 = vmatpush1.msra.mxu0 %v1454
  %1473 = vmatprep.subr.mxu0 0.0
  %1474 = vmatpush1.msra.mxu0 %v1455
  %1475 = vmatprep.subr.mxu0 0.0
  %1476 = vmatpush1.msra.mxu0 %v1456
  %1477 = vmatprep.subr.mxu0 0.0
  %1478 = vmatpush1.msra.mxu0 0.0
  %1479 = vmatprep.subr.mxu0 0.0
  %1480 = vmatpush1.msra.mxu0 0.0
  %1481 = vmatprep.subr.mxu0 0.0
  %1482 = vmatpush1.msra.mxu0 0.0
  %1483 = vmatprep.subr.mxu0 0.0
  %1484 = vmatpush1.msra.mxu0 0.0
  %1485 = vmatprep.subr.mxu0 0.0
  %1486 = vmatpush1.msra.mxu0 0.0
  %1487 = vmatprep.subr.mxu0 0.0
  %1488 = vmatpush1.msra.mxu0 0.0
  %1489 = vmatprep.subr.mxu0 0.0
  %1490 = vmatpush1.msra.mxu0 0.0
  %1491 = vmatprep.subr.mxu0 0.0
  %1492 = vmatpush1.msra.mxu0 0.0
  %1493 = vmatprep.subr.mxu0 0.0
  %1494 = vmatpush1.msra.mxu0 0.0
  %1495 = vmatprep.subr.mxu0 0.0
  %1496 = vmatpush1.msra.mxu0 0.0
  %1497 = vmatprep.subr.mxu0 0.0
  %1498 = vmatpush1.msra.mxu0 0.0
  %1499 = vmatprep.subr.mxu0 0.0
  %1500 = vmatpush1.msra.mxu0 0.0
  %1501 = vmatprep.subr.mxu0 0.0
  %1502 = vmatpush1.msra.mxu0 0.0
  %1503 = vmatprep.subr.mxu0 0.0
  %1504 = vmatpush1.msra.mxu0 0.0
  %1505 = vmatprep.subr.mxu0 0.0
  %1506 = vmatpush1.msra.mxu0 0.0
  %1507 = vmatprep.subr.mxu0 0.0
  %1508 = vmatpush1.msra.mxu0 0.0
  %1509 = vmatprep.subr.mxu0 0.0
  %1510 = vmatpush1.msra.mxu0 0.0
  %1511 = vmatprep.subr.mxu0 0.0
  %1512 = vmatpush1.msra.mxu0 0.0
  %1513 = vmatprep.subr.mxu0 0.0
  %1514 = vmatpush1.msra.mxu0 0.0
  %1515 = vmatprep.subr.mxu0 0.0
  %1516 = vmatpush1.msra.mxu0 0.0
  %1517 = vmatprep.subr.mxu0 0.0
  %1518 = vmatpush1.msra.mxu0 0.0
  %1519 = vmatprep.subr.mxu0 0.0
  %1520 = vmatpush1.msra.mxu0 0.0
  %1521 = vmatprep.subr.mxu0 0.0
  %1522 = vmatpush1.msra.mxu0 0.0
  %1523 = vmatprep.subr.mxu0 0.0
  %1524 = vmatpush1.msra.mxu0 0.0
  %1525 = vmatprep.subr.mxu0 0.0
  %1526 = vmatpush1.msra.mxu0 0.0
  %1527 = vmatprep.subr.mxu0 0.0
  %1528 = vmatpush1.msra.mxu0 0.0
  %1529 = vmatprep.subr.mxu0 0.0
  %1530 = vmatpush1.msra.mxu0 0.0
  %1531 = vmatprep.subr.mxu0 0.0
  %1532 = vmatpush1.msra.mxu0 0.0
  %1533 = vmatprep.mubr.f32.mxu0 0.0
  %1534 = vmatmul.mubr.f32.gmra.mrb[0].mxu0 %v1467
  %v1535 = vpop.f32.mrb[0].mxu0
  %v1536 = vadd.f32 %v1462, %v1535
  %v1537 = vpop.f32.mrb[0].mxu0
  %1538 = vdwg.mxu0
  %v1539 = vmax.f32 %v1536, 0.0
  %v1540 = vld [vmem:[%s11] sm:$0xff]
  %v1541 = vld [vmem:[%s11 + $0x8] sm:$0xff]
  %v1542 = vld [vmem:[#allocation2] sm:$0x1]
  %v1544 = vlaneseq
  %v1545 = vshrl.u32 %v1544, 7
  %v1546 = vsub.s32 0, %v1545
  %v1547 = vrot.slane %v1542, %v1546
  %vm1549 = vcmask 130048
  %v1551 = vsel %vm1549, %v1539, 0
  %1553 = vmatprep.subr.mxu0 0.0
  %1554 = vmatpush1.msra.mxu0 %v1540
  %1555 = vmatprep.subr.mxu0 0.0
  %1556 = vmatpush1.msra.mxu0 %v1541
  %1557 = vmatprep.subr.mxu0 0.0
  %1558 = vmatpush1.msra.mxu0 0.0
  %1559 = vmatprep.subr.mxu0 0.0
  %1560 = vmatpush1.msra.mxu0 0.0
  %1561 = vmatprep.subr.mxu0 0.0
  %1562 = vmatpush1.msra.mxu0 0.0
  %1563 = vmatprep.subr.mxu0 0.0
  %1564 = vmatpush1.msra.mxu0 0.0
  %1565 = vmatprep.subr.mxu0 0.0
  %1566 = vmatpush1.msra.mxu0 0.0
  %1567 = vmatprep.subr.mxu0 0.0
  %1568 = vmatpush1.msra.mxu0 0.0
  %1569 = vmatprep.subr.mxu0 0.0
  %1570 = vmatpush1.msra.mxu0 0.0
  %1571 = vmatprep.subr.mxu0 0.0
  %1572 = vmatpush1.msra.mxu0 0.0
  %1573 = vmatprep.subr.mxu0 0.0
  %1574 = vmatpush1.msra.mxu0 0.0
  %1575 = vmatprep.subr.mxu0 0.0
  %1576 = vmatpush1.msra.mxu0 0.0
  %1577 = vmatprep.subr.mxu0 0.0
  %1578 = vmatpush1.msra.mxu0 0.0
  %1579 = vmatprep.subr.mxu0 0.0
  %1580 = vmatpush1.msra.mxu0 0.0
  %1581 = vmatprep.subr.mxu0 0.0
  %1582 = vmatpush1.msra.mxu0 0.0
  %1583 = vmatprep.subr.mxu0 0.0
  %1584 = vmatpush1.msra.mxu0 0.0
  %1585 = vmatprep.subr.mxu0 0.0
  %1586 = vmatpush1.msra.mxu0 0.0
  %1587 = vmatprep.subr.mxu0 0.0
  %1588 = vmatpush1.msra.mxu0 0.0
  %1589 = vmatprep.subr.mxu0 0.0
  %1590 = vmatpush1.msra.mxu0 0.0
  %1591 = vmatprep.subr.mxu0 0.0
  %1592 = vmatpush1.msra.mxu0 0.0
  %1593 = vmatprep.subr.mxu0 0.0
  %1594 = vmatpush1.msra.mxu0 0.0
  %1595 = vmatprep.subr.mxu0 0.0
  %1596 = vmatpush1.msra.mxu0 0.0
  %1597 = vmatprep.subr.mxu0 0.0
  %1598 = vmatpush1.msra.mxu0 0.0
  %1599 = vmatprep.subr.mxu0 0.0
  %1600 = vmatpush1.msra.mxu0 0.0
  %1601 = vmatprep.subr.mxu0 0.0
  %1602 = vmatpush1.msra.mxu0 0.0
  %1603 = vmatprep.subr.mxu0 0.0
  %1604 = vmatpush1.msra.mxu0 0.0
  %1605 = vmatprep.subr.mxu0 0.0
  %1606 = vmatpush1.msra.mxu0 0.0
  %1607 = vmatprep.subr.mxu0 0.0
  %1608 = vmatpush1.msra.mxu0 0.0
  %1609 = vmatprep.subr.mxu0 0.0
  %1610 = vmatpush1.msra.mxu0 0.0
  %1611 = vmatprep.subr.mxu0 0.0
  %1612 = vmatpush1.msra.mxu0 0.0
  %1613 = vmatprep.subr.mxu0 0.0
  %1614 = vmatpush1.msra.mxu0 0.0
  %1615 = vmatprep.subr.mxu0 0.0
  %1616 = vmatpush1.msra.mxu0 0.0
  %1617 = vmatprep.mubr.f32.mxu0 0.0
  %1618 = vmatmul.mubr.f32.gmra.mrb[0].mxu0 %v1551
  %v1619 = vpop.f32.mrb[0].mxu0
  %v1620 = vadd.f32 %v1547, %v1619
  %v1621 = vpop.f32.mrb[0].mxu0
  %1622 = vdwg.mxu0
  %vm1623 = vcmask 7168
  %1624 = vst.msk [vmem:[%s13] sm:$0xff] %vm1623, %v1620
  // Predicated region
  $region54: #{tpu_custom_call.1} parent=0 // pred_check
    _
  $region55: #{tpu_custom_call.1} parent=0 // pred_check_branch
    %1626 = sbr.rel (0) target = $region57
  $region56: #{tpu_custom_call.1} parent=0 // pred_region
    _
  $region57: #{tpu_custom_call.1} parent=0 // pred_fallthru
    _
  // Predicated region
  $region58: #{tpu_custom_call.1} parent=0 // pred_check
    _
  $region59: #{tpu_custom_call.1} parent=0 // pred_check_branch
    %1628 = sbr.rel (0) target = $region61
  $region60: #{tpu_custom_call.1} parent=0 // pred_region
    _
  $region61: #{tpu_custom_call.1} parent=0 // pred_fallthru
    _

</llo_original>
